<compile_context>
chip_gen: v7x
topology: tpu7x:2x2x1
jax: 0.10.0
libtpu: 0.0.40
codegen_flags: <defaults>
</compile_context>

<pallas_src>
import functools

import jax
import jax.numpy as jnp
from jax.experimental import pallas as pl
from jax.experimental.pallas import tpu as pltpu


def _round_up(x, m):
    return (x + m - 1) // m * m


# ---------------------------------------------------------------------------
# Kernel 1 (per layer): projection  z = feat @ W  and attention scores
# s = z @ A, where A is a host-built block-diagonal [H*F, 2H] matrix so that
# s[:, h] = el_h and s[:, H+h] = er_h (one MXU matmul instead of 2H XLU
# cross-lane reductions).
# ---------------------------------------------------------------------------
def _proj_kernel(feat_ref, w_ref, a_ref, z_ref, s_ref):
    z = jnp.dot(feat_ref[...].astype(jnp.bfloat16), w_ref[...],
                preferred_element_type=jnp.float32)            # [TM, H*F] f32
    s_ref[...] = jnp.dot(z.astype(jnp.bfloat16), a_ref[...],
                         preferred_element_type=jnp.float32)   # [TM, 2H]
    z_ref[...] = z.astype(jnp.bfloat16)                        # bf16 for MXU reuse


def proj_call(feat_pad, w_bf16, a_bf16, *, tile_m):
    n_pad, d_in = feat_pad.shape
    hf = w_bf16.shape[1]
    two_h = a_bf16.shape[1]
    cost = pl.CostEstimate(
        flops=int(2 * n_pad * d_in * hf + 2 * n_pad * hf * two_h),
        transcendentals=0,
        bytes_accessed=int(4 * n_pad * d_in + 2 * n_pad * hf + 4 * n_pad * two_h),
    )
    return pl.pallas_call(
        _proj_kernel,
        out_shape=(jax.ShapeDtypeStruct((n_pad, hf), jnp.bfloat16),
                   jax.ShapeDtypeStruct((n_pad, two_h), jnp.float32)),
        grid=(n_pad // tile_m,),
        in_specs=[
            pl.BlockSpec((tile_m, d_in), lambda i: (i, 0)),
            pl.BlockSpec((d_in, hf), lambda i: (0, 0)),        # resident
            pl.BlockSpec((hf, two_h), lambda i: (0, 0)),       # resident
        ],
        out_specs=(pl.BlockSpec((tile_m, hf), lambda i: (i, 0)),
                   pl.BlockSpec((tile_m, two_h), lambda i: (i, 0))),
        compiler_params=pltpu.CompilerParams(
            dimension_semantics=("parallel",),
            vmem_limit_bytes=32 * 1024 * 1024),
        cost_estimate=cost,
    )(feat_pad, w_bf16, a_bf16)


# ---------------------------------------------------------------------------
# Kernel 2 (per layer): masked edge-softmax attention + aggregation + folded
# BatchNorm1d(eval) + ELU, tiled over destination nodes v.
#   e[v, u] = LeakyReLU(el[u] + er[v]) + bias[v, u]   (bias = 0 / -1e30)
#   out[v]  = ELU( BN( sum_u softmax_u(e[v, :])[u] * z[u] ) )
# ---------------------------------------------------------------------------
def _attn_kernel(el_t_ref, er_ref, z_ref, bias_ref, scale_ref, shift_ref,
                 out_ref, *, num_heads, out_feats, negative_slope):
    bias = bias_ref[...].astype(jnp.float32)                   # [TV, N] hoisted mask
    # Zero-in-degree guard (DGL would reject such graphs); also neutralizes
    # padded destination rows.
    has_edge = jnp.max(bias, axis=-1, keepdims=True) > -1e20   # [TV, 1]
    er = er_ref[...]                                           # [TV, H]

    head_out = []
    for h in range(num_heads):                                 # static unroll (small H)
        e = er[:, h:h + 1] + el_t_ref[h:h + 1, :]              # [TV, N]
        e = jnp.where(e > 0, e, negative_slope * e) + bias     # LeakyReLU + mask bias
        m = jnp.max(e, axis=-1, keepdims=True)                 # [TV, 1]
        p = jnp.exp(e - m)                                     # masked entries -> 0
        s = jnp.sum(p, axis=-1, keepdims=True)                 # [TV, 1]
        z_h = z_ref[:, h * out_feats:(h + 1) * out_feats]      # [N, F] bf16
        rst = jnp.dot(p.astype(jnp.bfloat16), z_h,
                      preferred_element_type=jnp.float32)      # [TV, F] (MXU)
        # deferred softmax normalization (EUP reciprocal, N*F muls not N*N divs)
        rst = rst * pl.reciprocal(s, approx=True)
        head_out.append(rst)

    agg = jnp.concatenate(head_out, axis=-1)                   # [TV, H*F] lane-dense
    agg = jnp.where(has_edge, agg, 0.0)
    y = agg * scale_ref[...] + shift_ref[...]                  # BatchNorm1d (eval, folded)
    out_ref[...] = jnp.where(y > 0, y, jnp.exp(jnp.minimum(y, 0.0)) - 1.0)  # ELU


def attn_call(el_t, er, z_bf16, bias_t, bn_scale, bn_shift, *,
              num_heads, out_feats, negative_slope, tile_v):
    n_pad = z_bf16.shape[0]
    hf = num_heads * out_feats
    cost = pl.CostEstimate(
        flops=int(2 * n_pad * n_pad * hf + 6 * num_heads * n_pad * n_pad),
        transcendentals=int(num_heads * n_pad * n_pad),
        bytes_accessed=int(2 * n_pad * n_pad + 2 * n_pad * hf + 4 * n_pad * hf),
    )
    kernel = functools.partial(_attn_kernel, num_heads=num_heads,
                               out_feats=out_feats,
                               negative_slope=negative_slope)
    return pl.pallas_call(
        kernel,
        out_shape=jax.ShapeDtypeStruct((n_pad, hf), jnp.float32),
        grid=(n_pad // tile_v,),
        in_specs=[
            pl.BlockSpec((num_heads, n_pad), lambda i: (0, 0)),   # el_t (resident)
            pl.BlockSpec((tile_v, num_heads), lambda i: (i, 0)),  # er (v tile)
            pl.BlockSpec((n_pad, hf), lambda i: (0, 0)),          # z (resident, bf16)
            pl.BlockSpec((tile_v, n_pad), lambda i: (i, 0)),      # adj bias (v tile, bf16)
            pl.BlockSpec((1, hf), lambda i: (0, 0)),              # BN scale
            pl.BlockSpec((1, hf), lambda i: (0, 0)),              # BN shift
        ],
        out_specs=pl.BlockSpec((tile_v, hf), lambda i: (i, 0)),
        compiler_params=pltpu.CompilerParams(
            dimension_semantics=("parallel",),
            vmem_limit_bytes=32 * 1024 * 1024),
        cost_estimate=cost,
    )(el_t, er, z_bf16, bias_t, bn_scale, bn_shift)


# ---------------------------------------------------------------------------
# Kernel 3: graph MaxPooling (over valid nodes) + final Linear head.
# ---------------------------------------------------------------------------
def _pool_linear_kernel(h_ref, w_ref, b_ref, logits_ref, hpool_ref, *, n_valid):
    row = jax.lax.broadcasted_iota(jnp.int32, (h_ref.shape[0], 1), 0)
    hm = jnp.where(row < n_valid, h_ref[...], -jnp.inf)        # ignore padded rows
    hp = jnp.max(hm, axis=0, keepdims=True)                    # [1, D]
    hpool_ref[...] = hp
    logits_ref[...] = (jnp.dot(hp, w_ref[...],
                               preferred_element_type=jnp.float32)
                       + b_ref[...])                           # [1, C]


def pool_linear_call(h_pad, w, b, *, n_valid):
    n_pad, d = h_pad.shape
    c = w.shape[1]
    kernel = functools.partial(_pool_linear_kernel, n_valid=n_valid)
    return pl.pallas_call(
        kernel,
        out_shape=(jax.ShapeDtypeStruct((1, c), jnp.float32),
                   jax.ShapeDtypeStruct((1, d), jnp.float32)),
    )(h_pad, w, b)


# ---------------------------------------------------------------------------
# Per-layer wrapper: fold BN, build block-diagonal attention weights, call
# the two kernels.  (Host-side prep is a handful of tiny jnp ops.)
# ---------------------------------------------------------------------------
def gat_layer_call(feat_pad, bias_t, layer, *, num_heads, out_feats,
                   negative_slope, tile_v, eps=1e-5):
    nh, f = num_heads, out_feats
    # BatchNorm1d (eval) folded into scale/shift.
    scale = layer["gamma"] * jax.lax.rsqrt(layer["var"] + eps)
    shift = layer["beta"] - layer["mean"] * scale
    # Block-diagonal attention weights: (z @ A)[:, h] = el_h, [:, H+h] = er_h.
    a = jnp.zeros((nh * f, 2 * nh), jnp.float32)
    for h in range(nh):
        a = a.at[h * f:(h + 1) * f, h].set(layer["attn_l"][h])
        a = a.at[h * f:(h + 1) * f, nh + h].set(layer["attn_r"][h])

    z_bf16, s = proj_call(feat_pad, layer["w"].astype(jnp.bfloat16),
                          a.astype(jnp.bfloat16), tile_m=tile_v)
    el_t = s[:, :nh].T                     # [H, N_pad] (tiny glue transpose)
    er = s[:, nh:]                         # [N_pad, H]
    return attn_call(el_t, er, z_bf16, bias_t, scale, shift,
                     num_heads=nh, out_feats=f,
                     negative_slope=negative_slope, tile_v=tile_v)


# ---------------------------------------------------------------------------
# Full GAT forward.
# ---------------------------------------------------------------------------
def gat_forward(adj, x, params, *, heads, num_hidden, negative_slope=0.2,
                max_tile_v=256):
    n = x.shape[0]
    tile_v = min(max_tile_v, _round_up(n, 8))      # multiple of 8 sublanes
    n_pad = _round_up(n, tile_v)
    pad = n_pad - n

    feat = jnp.pad(x, ((0, pad), (0, 0)))
    adj_pad = jnp.pad(adj, ((0, pad), (0, pad)))   # padded nodes have no edges
    # Pre-baked additive mask in [dst, src] layout, bf16 to halve HBM traffic.
    bias_t = jnp.where(adj_pad.T > 0, 0.0, -1e30).astype(jnp.bfloat16)

    h = feat
    for l, layer in enumerate(params["layers"]):
        h = gat_layer_call(h, bias_t, layer, num_heads=heads[l],
                           out_feats=num_hidden,
                           negative_slope=negative_slope, tile_v=tile_v)
    logits, h_pool = pool_linear_call(h, params["pred_w"], params["pred_b"],
                                      n_valid=n)
    return logits, h_pool


def init_params(key, *, num_layers, in_dim, num_hidden, num_classes, heads):
    params = {"layers": []}
    dims_in = [in_dim] + [num_hidden * heads[l] for l in range(num_layers - 1)]
    for l in range(num_layers):
        key, k1, k2, k3 = jax.random.split(key, 4)
        d_in = dims_in[l]
        d_out = num_hidden * heads[l]
        layer = {
            # fc weight stored as [d_in, H*F] (transposed PyTorch layout), no bias.
            "w": 0.1 * jax.random.normal(k1, (d_in, d_out), jnp.float32),
            "attn_l": 0.1 * jax.random.normal(k2, (heads[l], num_hidden), jnp.float32),
            "attn_r": 0.1 * jax.random.normal(k3, (heads[l], num_hidden), jnp.float32),
            # BatchNorm1d (eval) default init.
            "gamma": jnp.ones((1, d_out), jnp.float32),
            "beta": jnp.zeros((1, d_out), jnp.float32),
            "mean": jnp.zeros((1, d_out), jnp.float32),
            "var": jnp.ones((1, d_out), jnp.float32),
        }
        params["layers"].append(layer)
    key, k1, k2 = jax.random.split(key, 3)
    d_last = num_hidden * heads[-1]
    params["pred_w"] = 0.1 * jax.random.normal(k1, (d_last, num_classes), jnp.float32)
    params["pred_b"] = 0.1 * jax.random.normal(k2, (1, num_classes), jnp.float32)
    return params


if __name__ == "__main__":
    # Small deterministic problem: one graph of N nodes; tile_v=32 -> 2-step grid.
    N = 64
    num_layers = 2
    in_dim = 8
    num_hidden = 16
    num_classes = 4
    heads = (2, 2)

    key = jax.random.PRNGKey(0)
    kx, ka, kp = jax.random.split(key, 3)

    x = jax.random.normal(kx, (N, in_dim), jnp.float32)

    # Random sparse-ish adjacency with self-loops so every node has an in-edge.
    adj = (jax.random.uniform(ka, (N, N)) < 0.15).astype(jnp.float32)
    adj = jnp.maximum(adj, jnp.eye(N, dtype=jnp.float32))

    params = init_params(kp, num_layers=num_layers, in_dim=in_dim,
                         num_hidden=num_hidden, num_classes=num_classes,
                         heads=heads)

    fwd = jax.jit(functools.partial(gat_forward, heads=heads,
                                    num_hidden=num_hidden, max_tile_v=32))
    logits, h_pool = fwd(adj, x, params)
    jax.block_until_ready((logits, h_pool))

    assert logits.shape == (1, num_classes)
    assert h_pool.shape == (1, num_hidden * heads[-1])
    assert bool(jnp.all(jnp.isfinite(logits))) and bool(jnp.all(jnp.isfinite(h_pool)))
    print("KERNEL_OK")
</pallas_src>

<mosaic_0001>
module attributes {stable_mosaic.version = 11 : i64} {
  func.func @_proj_kernel(%arg0: i32, %arg1: memref<32x8xf32, #tpu.memory_space<vmem>>, %arg2: memref<8x32xbf16, #tpu.memory_space<vmem>>, %arg3: memref<32x4xbf16, #tpu.memory_space<vmem>>, %arg4: memref<32x32xbf16, #tpu.memory_space<vmem>>, %arg5: memref<32x4xf32, #tpu.memory_space<vmem>>) attributes {dimension_semantics = [#tpu.dimension_semantics<parallel>], iteration_bounds = array<i64: 2>, scalar_prefetch = 0 : i64, scratch_operands = 0 : i64, tpu.core_type = #tpu.core_type<tc>, window_params = [{transform_indices = @transform_0, window_bounds = array<i64: 32, 8>}, {pipeline_mode = #tpu.pipeline_mode<synchronous>, transform_indices = @transform_1, window_bounds = array<i64: 8, 32>}, {pipeline_mode = #tpu.pipeline_mode<synchronous>, transform_indices = @transform_2, window_bounds = array<i64: 32, 4>}, {transform_indices = @transform_3, window_bounds = array<i64: 32, 32>}, {transform_indices = @transform_4, window_bounds = array<i64: 32, 4>}]} {
    %c0 = arith.constant 0 : index
    %c0_0 = arith.constant 0 : index
    %0 = vector.load %arg1[%c0, %c0_0] : memref<32x8xf32, #tpu.memory_space<vmem>>, vector<32x8xf32>
    %1 = arith.truncf %0 : vector<32x8xf32> to vector<32x8xbf16>
    %c0_1 = arith.constant 0 : index
    %c0_2 = arith.constant 0 : index
    %2 = vector.load %arg2[%c0_1, %c0_2] : memref<8x32xbf16, #tpu.memory_space<vmem>>, vector<8x32xbf16>
    %cst = arith.constant dense<0.000000e+00> : vector<32x32xf32>
    %3 = tpu.matmul %1, %2, %cst {dimension_numbers = #tpu.dot_dimension_numbers<[1], [0], [0], [1], [0, 0, 1, 1], [], []>} : vector<32x8xbf16>, vector<8x32xbf16>, vector<32x32xf32> -> vector<32x32xf32>
    %4 = arith.truncf %3 : vector<32x32xf32> to vector<32x32xbf16>
    %c0_3 = arith.constant 0 : index
    %c0_4 = arith.constant 0 : index
    %5 = vector.load %arg3[%c0_3, %c0_4] : memref<32x4xbf16, #tpu.memory_space<vmem>>, vector<32x4xbf16>
    %cst_5 = arith.constant dense<0.000000e+00> : vector<32x4xf32>
    %6 = tpu.matmul %4, %5, %cst_5 {dimension_numbers = #tpu.dot_dimension_numbers<[1], [0], [0], [1], [0, 0, 1, 1], [], []>} : vector<32x32xbf16>, vector<32x4xbf16>, vector<32x4xf32> -> vector<32x4xf32>
    %c0_6 = arith.constant 0 : index
    %c0_7 = arith.constant 0 : index
    %7 = vector.load %arg5[%c0_6, %c0_7] : memref<32x4xf32, #tpu.memory_space<vmem>>, vector<32x4xf32>
    tpu.vector_store %arg5[%c0_6, %c0_7], %6 {strides = array<i32>} : memref<32x4xf32, #tpu.memory_space<vmem>>, vector<32x4xf32>,
    %8 = arith.truncf %3 : vector<32x32xf32> to vector<32x32xbf16>
    %c0_8 = arith.constant 0 : index
    %c0_9 = arith.constant 0 : index
    %9 = vector.load %arg4[%c0_8, %c0_9] : memref<32x32xbf16, #tpu.memory_space<vmem>>, vector<32x32xbf16>
    tpu.vector_store %arg4[%c0_8, %c0_9], %8 {strides = array<i32>} : memref<32x32xbf16, #tpu.memory_space<vmem>>, vector<32x32xbf16>,
    return
  }
  func.func @transform_0(%arg0: i32) -> (i32, i32) {
    %c0_i32 = arith.constant 0 : i32
    %c0_i32_0 = arith.constant 0 : i32
    return %arg0, %c0_i32 : i32, i32
  }
  func.func @transform_1(%arg0: i32) -> (i32, i32) {
    %c0_i32 = arith.constant 0 : i32
    %c0_i32_0 = arith.constant 0 : i32
    %c0_i32_1 = arith.constant 0 : i32
    return %c0_i32, %c0_i32_0 : i32, i32
  }
  func.func @transform_2(%arg0: i32) -> (i32, i32) {
    %c0_i32 = arith.constant 0 : i32
    %c0_i32_0 = arith.constant 0 : i32
    %c0_i32_1 = arith.constant 0 : i32
    return %c0_i32, %c0_i32_0 : i32, i32
  }
  func.func @transform_3(%arg0: i32) -> (i32, i32) {
    %c0_i32 = arith.constant 0 : i32
    %c0_i32_0 = arith.constant 0 : i32
    return %arg0, %c0_i32 : i32, i32
  }
  func.func @transform_4(%arg0: i32) -> (i32, i32) {
    %c0_i32 = arith.constant 0 : i32
    %c0_i32_0 = arith.constant 0 : i32
    return %arg0, %c0_i32 : i32, i32
  }
}

module attributes {stable_mosaic.version = 11 : i64} {
  func.func @_proj_kernel(%arg0: i32, %arg1: memref<32x32xf32, #tpu.memory_space<vmem>>, %arg2: memref<32x32xbf16, #tpu.memory_space<vmem>>, %arg3: memref<32x4xbf16, #tpu.memory_space<vmem>>, %arg4: memref<32x32xbf16, #tpu.memory_space<vmem>>, %arg5: memref<32x4xf32, #tpu.memory_space<vmem>>) attributes {dimension_semantics = [#tpu.dimension_semantics<parallel>], iteration_bounds = array<i64: 2>, scalar_prefetch = 0 : i64, scratch_operands = 0 : i64, tpu.core_type = #tpu.core_type<tc>, window_params = [{transform_indices = @transform_0, window_bounds = array<i64: 32, 32>}, {pipeline_mode = #tpu.pipeline_mode<synchronous>, transform_indices = @transform_1, window_bounds = array<i64: 32, 32>}, {pipeline_mode = #tpu.pipeline_mode<synchronous>, transform_indices = @transform_2, window_bounds = array<i64: 32, 4>}, {transform_indices = @transform_3, window_bounds = array<i64: 32, 32>}, {transform_indices = @transform_4, window_bounds = array<i64: 32, 4>}]} {
    %c0 = arith.constant 0 : index
    %c0_0 = arith.constant 0 : index
    %0 = vector.load %arg1[%c0, %c0_0] : memref<32x32xf32, #tpu.memory_space<vmem>>, vector<32x32xf32>
    %1 = arith.truncf %0 : vector<32x32xf32> to vector<32x32xbf16>
    %c0_1 = arith.constant 0 : index
    %c0_2 = arith.constant 0 : index
    %2 = vector.load %arg2[%c0_1, %c0_2] : memref<32x32xbf16, #tpu.memory_space<vmem>>, vector<32x32xbf16>
    %cst = arith.constant dense<0.000000e+00> : vector<32x32xf32>
    %3 = tpu.matmul %1, %2, %cst {dimension_numbers = #tpu.dot_dimension_numbers<[1], [0], [0], [1], [0, 0, 1, 1], [], []>} : vector<32x32xbf16>, vector<32x32xbf16>, vector<32x32xf32> -> vector<32x32xf32>
    %4 = arith.truncf %3 : vector<32x32xf32> to vector<32x32xbf16>
    %c0_3 = arith.constant 0 : index
    %c0_4 = arith.constant 0 : index
    %5 = vector.load %arg3[%c0_3, %c0_4] : memref<32x4xbf16, #tpu.memory_space<vmem>>, vector<32x4xbf16>
    %cst_5 = arith.constant dense<0.000000e+00> : vector<32x4xf32>
    %6 = tpu.matmul %4, %5, %cst_5 {dimension_numbers = #tpu.dot_dimension_numbers<[1], [0], [0], [1], [0, 0, 1, 1], [], []>} : vector<32x32xbf16>, vector<32x4xbf16>, vector<32x4xf32> -> vector<32x4xf32>
    %c0_6 = arith.constant 0 : index
    %c0_7 = arith.constant 0 : index
    %7 = vector.load %arg5[%c0_6, %c0_7] : memref<32x4xf32, #tpu.memory_space<vmem>>, vector<32x4xf32>
    tpu.vector_store %arg5[%c0_6, %c0_7], %6 {strides = array<i32>} : memref<32x4xf32, #tpu.memory_space<vmem>>, vector<32x4xf32>,
    %8 = arith.truncf %3 : vector<32x32xf32> to vector<32x32xbf16>
    %c0_8 = arith.constant 0 : index
    %c0_9 = arith.constant 0 : index
    %9 = vector.load %arg4[%c0_8, %c0_9] : memref<32x32xbf16, #tpu.memory_space<vmem>>, vector<32x32xbf16>
    tpu.vector_store %arg4[%c0_8, %c0_9], %8 {strides = array<i32>} : memref<32x32xbf16, #tpu.memory_space<vmem>>, vector<32x32xbf16>,
    return
  }
  func.func @transform_0(%arg0: i32) -> (i32, i32) {
    %c0_i32 = arith.constant 0 : i32
    %c0_i32_0 = arith.constant 0 : i32
    return %arg0, %c0_i32 : i32, i32
  }
  func.func @transform_1(%arg0: i32) -> (i32, i32) {
    %c0_i32 = arith.constant 0 : i32
    %c0_i32_0 = arith.constant 0 : i32
    %c0_i32_1 = arith.constant 0 : i32
    return %c0_i32, %c0_i32_0 : i32, i32
  }
  func.func @transform_2(%arg0: i32) -> (i32, i32) {
    %c0_i32 = arith.constant 0 : i32
    %c0_i32_0 = arith.constant 0 : i32
    %c0_i32_1 = arith.constant 0 : i32
    return %c0_i32, %c0_i32_0 : i32, i32
  }
  func.func @transform_3(%arg0: i32) -> (i32, i32) {
    %c0_i32 = arith.constant 0 : i32
    %c0_i32_0 = arith.constant 0 : i32
    return %arg0, %c0_i32 : i32, i32
  }
  func.func @transform_4(%arg0: i32) -> (i32, i32) {
    %c0_i32 = arith.constant 0 : i32
    %c0_i32_0 = arith.constant 0 : i32
    return %arg0, %c0_i32 : i32, i32
  }
}

module attributes {stable_mosaic.version = 11 : i64} {
  func.func @_attn_kernel(%arg0: i32, %arg1: memref<2x64xf32, #tpu.memory_space<vmem>>, %arg2: memref<32x2xf32, #tpu.memory_space<vmem>>, %arg3: memref<64x32xbf16, #tpu.memory_space<vmem>>, %arg4: memref<32x64xbf16, #tpu.memory_space<vmem>>, %arg5: memref<1x32xf32, #tpu.memory_space<vmem>>, %arg6: memref<1x32xf32, #tpu.memory_space<vmem>>, %arg7: memref<32x32xf32, #tpu.memory_space<vmem>>) attributes {dimension_semantics = [#tpu.dimension_semantics<parallel>], iteration_bounds = array<i64: 2>, scalar_prefetch = 0 : i64, scratch_operands = 0 : i64, tpu.core_type = #tpu.core_type<tc>, window_params = [{pipeline_mode = #tpu.pipeline_mode<synchronous>, transform_indices = @transform_0, window_bounds = array<i64: 2, 64>}, {transform_indices = @transform_1, window_bounds = array<i64: 32, 2>}, {pipeline_mode = #tpu.pipeline_mode<synchronous>, transform_indices = @transform_2, window_bounds = array<i64: 64, 32>}, {transform_indices = @transform_3, window_bounds = array<i64: 32, 64>}, {pipeline_mode = #tpu.pipeline_mode<synchronous>, transform_indices = @transform_4, window_bounds = array<i64: 1, 32>}, {pipeline_mode = #tpu.pipeline_mode<synchronous>, transform_indices = @transform_5, window_bounds = array<i64: 1, 32>}, {transform_indices = @transform_6, window_bounds = array<i64: 32, 32>}]} {
    %c0 = arith.constant 0 : index
    %c0_0 = arith.constant 0 : index
    %0 = vector.load %arg4[%c0, %c0_0] : memref<32x64xbf16, #tpu.memory_space<vmem>>, vector<32x64xbf16>
    %1 = arith.extf %0 : vector<32x64xbf16> to vector<32x64xf32>
    %cst = arith.constant dense<0xFF800000> : vector<32xf32>
    %2 = vector.multi_reduction <maximumf>, %1, %cst [1] : vector<32x64xf32> to vector<32xf32>
    %3 = vector.shape_cast %2 : vector<32xf32> to vector<32x1xf32>
    %cst_1 = arith.constant -1.000000e+20 : f32
    %4 = vector.broadcast %cst_1 : f32 to vector<32x1xf32>
    %5 = arith.cmpf ogt, %3, %4 : vector<32x1xf32>
    %c0_2 = arith.constant 0 : index
    %c0_3 = arith.constant 0 : index
    %6 = vector.load %arg2[%c0_2, %c0_3] : memref<32x2xf32, #tpu.memory_space<vmem>>, vector<32x2xf32>
    %7 = vector.extract_strided_slice %6 {offsets = [0, 0], sizes = [32, 1], strides = [1, 1]} : vector<32x2xf32> to vector<32x1xf32>
    %c0_4 = arith.constant 0 : index
    %c0_5 = arith.constant 0 : index
    %8 = vector.load %arg1[%c0_4, %c0_5] : memref<2x64xf32, #tpu.memory_space<vmem>>, vector<1x64xf32>
    %9 = vector.broadcast %7 : vector<32x1xf32> to vector<32x64xf32>
    %10 = vector.broadcast %8 : vector<1x64xf32> to vector<32x64xf32>
    %11 = arith.addf %9, %10 : vector<32x64xf32>
    %cst_6 = arith.constant 0.000000e+00 : f32
    %12 = vector.broadcast %cst_6 : f32 to vector<32x64xf32>
    %13 = arith.cmpf ogt, %11, %12 : vector<32x64xf32>
    %cst_7 = arith.constant 2.000000e-01 : f32
    %14 = vector.broadcast %cst_7 : f32 to vector<32x64xf32>
    %15 = arith.mulf %14, %11 : vector<32x64xf32>
    %16 = arith.select %13, %11, %15 : vector<32x64xi1>, vector<32x64xf32>
    %17 = arith.addf %16, %1 : vector<32x64xf32>
    %cst_8 = arith.constant dense<0xFF800000> : vector<32xf32>
    %18 = vector.multi_reduction <maximumf>, %17, %cst_8 [1] : vector<32x64xf32> to vector<32xf32>
    %19 = vector.shape_cast %18 : vector<32xf32> to vector<32x1xf32>
    %20 = vector.broadcast %19 : vector<32x1xf32> to vector<32x64xf32>
    %21 = arith.subf %17, %20 : vector<32x64xf32>
    %22 = math.exp %21 : vector<32x64xf32>
    %cst_9 = arith.constant dense<0.000000e+00> : vector<32xf32>
    %23 = vector.multi_reduction <add>, %22, %cst_9 [1] : vector<32x64xf32> to vector<32xf32>
    %24 = vector.shape_cast %23 : vector<32xf32> to vector<32x1xf32>
    %c0_10 = arith.constant 0 : index
    %c0_11 = arith.constant 0 : index
    %25 = vector.load %arg3[%c0_10, %c0_11] : memref<64x32xbf16, #tpu.memory_space<vmem>>, vector<64x16xbf16>
    %26 = arith.truncf %22 : vector<32x64xf32> to vector<32x64xbf16>
    %cst_12 = arith.constant dense<0.000000e+00> : vector<32x16xf32>
    %27 = tpu.matmul %26, %25, %cst_12 {dimension_numbers = #tpu.dot_dimension_numbers<[1], [0], [0], [1], [0, 0, 1, 1], [], []>} : vector<32x64xbf16>, vector<64x16xbf16>, vector<32x16xf32> -> vector<32x16xf32>
    %28 = tpu.reciprocal %24 {approx = true} : vector<32x1xf32> -> vector<32x1xf32>
    %29 = vector.broadcast %28 : vector<32x1xf32> to vector<32x16xf32>
    %30 = arith.mulf %27, %29 : vector<32x16xf32>
    %31 = vector.extract_strided_slice %6 {offsets = [0, 1], sizes = [32, 1], strides = [1, 1]} : vector<32x2xf32> to vector<32x1xf32>
    %c1 = arith.constant 1 : index
    %c0_13 = arith.constant 0 : index
    %32 = vector.load %arg1[%c1, %c0_13] : memref<2x64xf32, #tpu.memory_space<vmem>>, vector<1x64xf32>
    %33 = vector.broadcast %31 : vector<32x1xf32> to vector<32x64xf32>
    %34 = vector.broadcast %32 : vector<1x64xf32> to vector<32x64xf32>
    %35 = arith.addf %33, %34 : vector<32x64xf32>
    %cst_14 = arith.constant 0.000000e+00 : f32
    %36 = vector.broadcast %cst_14 : f32 to vector<32x64xf32>
    %37 = arith.cmpf ogt, %35, %36 : vector<32x64xf32>
    %cst_15 = arith.constant 2.000000e-01 : f32
    %38 = vector.broadcast %cst_15 : f32 to vector<32x64xf32>
    %39 = arith.mulf %38, %35 : vector<32x64xf32>
    %40 = arith.select %37, %35, %39 : vector<32x64xi1>, vector<32x64xf32>
    %41 = arith.addf %40, %1 : vector<32x64xf32>
    %cst_16 = arith.constant dense<0xFF800000> : vector<32xf32>
    %42 = vector.multi_reduction <maximumf>, %41, %cst_16 [1] : vector<32x64xf32> to vector<32xf32>
    %43 = vector.shape_cast %42 : vector<32xf32> to vector<32x1xf32>
    %44 = vector.broadcast %43 : vector<32x1xf32> to vector<32x64xf32>
    %45 = arith.subf %41, %44 : vector<32x64xf32>
    %46 = math.exp %45 : vector<32x64xf32>
    %cst_17 = arith.constant dense<0.000000e+00> : vector<32xf32>
    %47 = vector.multi_reduction <add>, %46, %cst_17 [1] : vector<32x64xf32> to vector<32xf32>
    %48 = vector.shape_cast %47 : vector<32xf32> to vector<32x1xf32>
    %c0_18 = arith.constant 0 : index
    %c16 = arith.constant 16 : index
    %49 = vector.load %arg3[%c0_18, %c16] : memref<64x32xbf16, #tpu.memory_space<vmem>>, vector<64x16xbf16>
    %50 = arith.truncf %46 : vector<32x64xf32> to vector<32x64xbf16>
    %cst_19 = arith.constant dense<0.000000e+00> : vector<32x16xf32>
    %51 = tpu.matmul %50, %49, %cst_19 {dimension_numbers = #tpu.dot_dimension_numbers<[1], [0], [0], [1], [0, 0, 1, 1], [], []>} : vector<32x64xbf16>, vector<64x16xbf16>, vector<32x16xf32> -> vector<32x16xf32>
    %52 = tpu.reciprocal %48 {approx = true} : vector<32x1xf32> -> vector<32x1xf32>
    %53 = vector.broadcast %52 : vector<32x1xf32> to vector<32x16xf32>
    %54 = arith.mulf %51, %53 : vector<32x16xf32>
    %55 = tpu.concatenate %30, %54 in 1 : vector<32x16xf32>, vector<32x16xf32> -> vector<32x32xf32>
    %cst_20 = arith.constant 0.000000e+00 : f32
    %56 = vector.shape_cast %5 : vector<32x1xi1> to vector<32x1xi1>
    %57 = vector.broadcast %56 : vector<32x1xi1> to vector<32x32xi1>
    %58 = vector.broadcast %cst_20 : f32 to vector<32x32xf32>
    %59 = arith.select %57, %55, %58 : vector<32x32xi1>, vector<32x32xf32>
    %c0_21 = arith.constant 0 : index
    %c0_22 = arith.constant 0 : index
    %60 = vector.load %arg5[%c0_21, %c0_22] : memref<1x32xf32, #tpu.memory_space<vmem>>, vector<1x32xf32>
    %61 = vector.broadcast %60 : vector<1x32xf32> to vector<32x32xf32>
    %62 = arith.mulf %59, %61 : vector<32x32xf32>
    %c0_23 = arith.constant 0 : index
    %c0_24 = arith.constant 0 : index
    %63 = vector.load %arg6[%c0_23, %c0_24] : memref<1x32xf32, #tpu.memory_space<vmem>>, vector<1x32xf32>
    %64 = vector.broadcast %63 : vector<1x32xf32> to vector<32x32xf32>
    %65 = arith.addf %62, %64 : vector<32x32xf32>
    %cst_25 = arith.constant 0.000000e+00 : f32
    %66 = vector.broadcast %cst_25 : f32 to vector<32x32xf32>
    %67 = arith.cmpf ogt, %65, %66 : vector<32x32xf32>
    %cst_26 = arith.constant 0.000000e+00 : f32
    %68 = vector.broadcast %cst_26 : f32 to vector<32x32xf32>
    %69 = arith.minimumf %65, %68 : vector<32x32xf32>
    %70 = math.exp %69 : vector<32x32xf32>
    %cst_27 = arith.constant 1.000000e+00 : f32
    %71 = vector.broadcast %cst_27 : f32 to vector<32x32xf32>
    %72 = arith.subf %70, %71 : vector<32x32xf32>
    %73 = arith.select %67, %65, %72 : vector<32x32xi1>, vector<32x32xf32>
    %c0_28 = arith.constant 0 : index
    %c0_29 = arith.constant 0 : index
    %74 = vector.load %arg7[%c0_28, %c0_29] : memref<32x32xf32, #tpu.memory_space<vmem>>, vector<32x32xf32>
    tpu.vector_store %arg7[%c0_28, %c0_29], %73 {strides = array<i32>} : memref<32x32xf32, #tpu.memory_space<vmem>>, vector<32x32xf32>,
    return
  }
  func.func @transform_0(%arg0: i32) -> (i32, i32) {
    %c0_i32 = arith.constant 0 : i32
    %c0_i32_0 = arith.constant 0 : i32
    %c0_i32_1 = arith.constant 0 : i32
    return %c0_i32, %c0_i32_0 : i32, i32
  }
  func.func @transform_1(%arg0: i32) -> (i32, i32) {
    %c0_i32 = arith.constant 0 : i32
    %c0_i32_0 = arith.constant 0 : i32
    return %arg0, %c0_i32 : i32, i32
  }
  func.func @transform_2(%arg0: i32) -> (i32, i32) {
    %c0_i32 = arith.constant 0 : i32
    %c0_i32_0 = arith.constant 0 : i32
    %c0_i32_1 = arith.constant 0 : i32
    return %c0_i32, %c0_i32_0 : i32, i32
  }
  func.func @transform_3(%arg0: i32) -> (i32, i32) {
    %c0_i32 = arith.constant 0 : i32
    %c0_i32_0 = arith.constant 0 : i32
    return %arg0, %c0_i32 : i32, i32
  }
  func.func @transform_4(%arg0: i32) -> (i32, i32) {
    %c0_i32 = arith.constant 0 : i32
    %c0_i32_0 = arith.constant 0 : i32
    %c0_i32_1 = arith.constant 0 : i32
    return %c0_i32, %c0_i32_0 : i32, i32
  }
  func.func @transform_5(%arg0: i32) -> (i32, i32) {
    %c0_i32 = arith.constant 0 : i32
    %c0_i32_0 = arith.constant 0 : i32
    %c0_i32_1 = arith.constant 0 : i32
    return %c0_i32, %c0_i32_0 : i32, i32
  }
  func.func @transform_6(%arg0: i32) -> (i32, i32) {
    %c0_i32 = arith.constant 0 : i32
    %c0_i32_0 = arith.constant 0 : i32
    return %arg0, %c0_i32 : i32, i32
  }
}

module attributes {stable_mosaic.version = 11 : i64} {
  func.func @_pool_linear_kernel(%arg0: memref<64x32xf32, #tpu.memory_space<vmem>>, %arg1: memref<32x4xf32, #tpu.memory_space<vmem>>, %arg2: memref<1x4xf32, #tpu.memory_space<vmem>>, %arg3: memref<1x4xf32, #tpu.memory_space<vmem>>, %arg4: memref<1x32xf32, #tpu.memory_space<vmem>>) attributes {dimension_semantics = [], scalar_prefetch = 0 : i64, scratch_operands = 0 : i64, tpu.core_type = #tpu.core_type<tc>} {
    %0 = tpu.iota {dimensions = array<i32: 0>} : vector<64x1xi32>
    %c64_i32 = arith.constant 64 : i32
    %1 = vector.broadcast %c64_i32 : i32 to vector<64x1xi32>
    %2 = arith.cmpi slt, %0, %1 : vector<64x1xi32>
    %c0 = arith.constant 0 : index
    %c0_0 = arith.constant 0 : index
    %3 = vector.load %arg0[%c0, %c0_0] : memref<64x32xf32, #tpu.memory_space<vmem>>, vector<64x32xf32>
    %cst = arith.constant 0xFF800000 : f32
    %4 = vector.shape_cast %2 : vector<64x1xi1> to vector<64x1xi1>
    %5 = vector.broadcast %4 : vector<64x1xi1> to vector<64x32xi1>
    %6 = vector.broadcast %cst : f32 to vector<64x32xf32>
    %7 = arith.select %5, %3, %6 : vector<64x32xi1>, vector<64x32xf32>
    %cst_1 = arith.constant dense<0xFF800000> : vector<32xf32>
    %8 = vector.multi_reduction <maximumf>, %7, %cst_1 [0] : vector<64x32xf32> to vector<32xf32>
    %9 = vector.shape_cast %8 : vector<32xf32> to vector<1x32xf32>
    %c0_2 = arith.constant 0 : index
    %c0_3 = arith.constant 0 : index
    %10 = vector.load %arg4[%c0_2, %c0_3] : memref<1x32xf32, #tpu.memory_space<vmem>>, vector<1x32xf32>
    tpu.vector_store %arg4[%c0_2, %c0_3], %9 {strides = array<i32>} : memref<1x32xf32, #tpu.memory_space<vmem>>, vector<1x32xf32>,
    %c0_4 = arith.constant 0 : index
    %c0_5 = arith.constant 0 : index
    %11 = vector.load %arg1[%c0_4, %c0_5] : memref<32x4xf32, #tpu.memory_space<vmem>>, vector<32x4xf32>
    %cst_6 = arith.constant dense<0.000000e+00> : vector<1x4xf32>
    %12 = tpu.matmul %9, %11, %cst_6 {dimension_numbers = #tpu.dot_dimension_numbers<[1], [0], [0], [1], [0, 0, 1, 1], [], []>} : vector<1x32xf32>, vector<32x4xf32>, vector<1x4xf32> -> vector<1x4xf32>
    %c0_7 = arith.constant 0 : index
    %c0_8 = arith.constant 0 : index
    %13 = vector.load %arg2[%c0_7, %c0_8] : memref<1x4xf32, #tpu.memory_space<vmem>>, vector<1x4xf32>
    %14 = arith.addf %12, %13 : vector<1x4xf32>
    %c0_9 = arith.constant 0 : index
    %c0_10 = arith.constant 0 : index
    %15 = vector.load %arg3[%c0_9, %c0_10] : memref<1x4xf32, #tpu.memory_space<vmem>>, vector<1x4xf32>
    tpu.vector_store %arg3[%c0_9, %c0_10], %14 {strides = array<i32>} : memref<1x4xf32, #tpu.memory_space<vmem>>, vector<1x4xf32>,
    return
  }
}

</mosaic_0001>

<llo_original>
// kernel: gat_forward.5
$region0: #{gat_forward.5}
  #allocation0 [shape = 'u32[]', space=smem, size = 0x4, offset = 0x4, fixed_abs, tag = 'smem constant byte address 0x4 - core index']
  #allocation1 [shape = 'u32[144,128]{1,0:T(1,128)}', space=vmem, size = 0x12000, scoped, tag = 'internal scratch']
  %s0 = inlined_call_operand.vmem [shape: f32[64,8], index: 0, kind: input, shape index: {}]
  %s1 = inlined_call_operand.vmem [shape: bf16[8,32], index: 1, kind: input, shape index: {}]
  %s2 = inlined_call_operand.vmem [shape: bf16[32,4], index: 2, kind: input, shape index: {}]
  %s3 = inlined_call_operand.vmem [shape: bf16[64,32], index: 3, kind: output, shape index: {0}]
  %s4 = inlined_call_operand.vmem [shape: f32[64,4], index: 4, kind: output, shape index: {1}]
  %5 = xla_tuple %s3, %s4
  %s6 = sld [smem:[#allocation0]]
  $region53: #{gat_forward.5} parent=0
    _
  %s8 = ssub.s32 1, %s6
  %s9 = scalar_select 0, %s8, %s6
  loop: start=0, step=1, limit=4
  $region2: #{gat_forward.5} parent=0 // loop_pre_header
    _
  $region3: #{gat_forward.5} parent=0 // loop_header
    %s11 = sphi 0, %s15
    %p12 = scmp.ge.s32.totalorder %s11, 4
    %s21 = sphi 0, %s23
    %s24 = sphi 0, %s21
    %s25 = sphi 0, %s24
    %s41 = sphi 0, %s25
    %s45 = sphi 0, %s45
    %s47 = sphi 0, %s45
    %s48 = sphi 0, %s47
    %s62 = sphi 0, %s48
    %s66 = sphi 0, %s66
    %s68 = sphi 0, %s66
    %s69 = sphi 0, %s68
    %s83 = sphi 0, %s69
    %s89 = sphi 0, %s91
    %s92 = sphi 0, %s89
    %s93 = sphi 0, %s92
    %s109 = sphi 0, %s93
    %s115 = sphi 0, %s117
    %s118 = sphi 0, %s115
    %s119 = sphi 0, %s118
    %s135 = sphi 0, %s119
  $region4: #{gat_forward.5} parent=0 // loop_header_branch
    %14 = sbr.rel (%p12) target = $region8
  $region5: #{gat_forward.5} parent=0 // loop_body
    %s16 = ssub.s32 %s11, 1
    %s17 = ssub.s32 %s11, 2
    %s18 = sadd.s32 %s11, 1
    %s19 = ssub.s32 %s11, %s18
    %p20 = scmp.eq.s32.totalorder %s19, 0
    %s22 = sadd.s32 %s21, 1
    %s23 = scalar_select %p20, %s21, %s22
    %p26 = pneg %p20
    %p27 = scmp.eq.s32.totalorder %s11, 1
    %p28 = por %p26, %p27
    %p29 = scmp.ne.s32.totalorder %s21, %s24
    %p30 = scmp.eq.s32.totalorder %s11, 0
    %p31 = por %p29, %p30
    %p32 = scmp.ne.s32.totalorder %s21, %s24
    %p33 = scmp.eq.s32.totalorder %s16, 1
    %p34 = por %p32, %p33
    %p35 = scmp.ne.s32.totalorder %s24, %s25
    %p36 = scmp.eq.s32.totalorder %s16, 0
    %p37 = por %p35, %p36
    %p38 = scmp.ne.s32.totalorder %s24, %s25
    %p39 = scmp.eq.s32.totalorder %s17, 1
    %p40 = por %p38, %p39
    %p42 = scmp.ne.s32.totalorder %s25, %s41
    %p43 = scmp.eq.s32.totalorder %s17, 0
    %p44 = por %p42, %p43
    %s46 = sadd.s32 %s45, 1
    %p49 = scmp.eq.s32.totalorder %s11, 1
    %p50 = scmp.ne.s32.totalorder %s45, %s47
    %p51 = scmp.eq.s32.totalorder %s11, 0
    %p52 = por %p50, %p51
    %p53 = scmp.ne.s32.totalorder %s45, %s47
    %p54 = scmp.eq.s32.totalorder %s16, 1
    %p55 = por %p53, %p54
    %p56 = scmp.ne.s32.totalorder %s47, %s48
    %p57 = scmp.eq.s32.totalorder %s16, 0
    %p58 = por %p56, %p57
    %p59 = scmp.ne.s32.totalorder %s47, %s48
    %p60 = scmp.eq.s32.totalorder %s17, 1
    %p61 = por %p59, %p60
    %p63 = scmp.ne.s32.totalorder %s48, %s62
    %p64 = scmp.eq.s32.totalorder %s17, 0
    %p65 = por %p63, %p64
    %s67 = sadd.s32 %s66, 1
    %p70 = scmp.eq.s32.totalorder %s11, 1
    %p71 = scmp.ne.s32.totalorder %s66, %s68
    %p72 = scmp.eq.s32.totalorder %s11, 0
    %p73 = por %p71, %p72
    %p74 = scmp.ne.s32.totalorder %s66, %s68
    %p75 = scmp.eq.s32.totalorder %s16, 1
    %p76 = por %p74, %p75
    %p77 = scmp.ne.s32.totalorder %s68, %s69
    %p78 = scmp.eq.s32.totalorder %s16, 0
    %p79 = por %p77, %p78
    %p80 = scmp.ne.s32.totalorder %s68, %s69
    %p81 = scmp.eq.s32.totalorder %s17, 1
    %p82 = por %p80, %p81
    %p84 = scmp.ne.s32.totalorder %s69, %s83
    %p85 = scmp.eq.s32.totalorder %s17, 0
    %p86 = por %p84, %p85
    %s87 = ssub.s32 %s11, %s18
    %p88 = scmp.eq.s32.totalorder %s87, 0
    %s90 = sadd.s32 %s89, 1
    %s91 = scalar_select %p88, %s89, %s90
    %p94 = pneg %p88
    %p95 = scmp.eq.s32.totalorder %s11, 1
    %p96 = por %p94, %p95
    %p97 = scmp.ne.s32.totalorder %s89, %s92
    %p98 = scmp.eq.s32.totalorder %s11, 0
    %p99 = por %p97, %p98
    %p100 = scmp.ne.s32.totalorder %s89, %s92
    %p101 = scmp.eq.s32.totalorder %s16, 1
    %p102 = por %p100, %p101
    %p103 = scmp.ne.s32.totalorder %s92, %s93
    %p104 = scmp.eq.s32.totalorder %s16, 0
    %p105 = por %p103, %p104
    %p106 = scmp.ne.s32.totalorder %s92, %s93
    %p107 = scmp.eq.s32.totalorder %s17, 1
    %p108 = por %p106, %p107
    %p110 = scmp.ne.s32.totalorder %s93, %s109
    %p111 = scmp.eq.s32.totalorder %s17, 0
    %p112 = por %p110, %p111
    %s113 = ssub.s32 %s11, %s18
    %p114 = scmp.eq.s32.totalorder %s113, 0
    %s116 = sadd.s32 %s115, 1
    %s117 = scalar_select %p114, %s115, %s116
    %p120 = pneg %p114
    %p121 = scmp.eq.s32.totalorder %s11, 1
    %p122 = por %p120, %p121
    %p123 = scmp.ne.s32.totalorder %s115, %s118
    %p124 = scmp.eq.s32.totalorder %s11, 0
    %p125 = por %p123, %p124
    %p126 = scmp.ne.s32.totalorder %s115, %s118
    %p127 = scmp.eq.s32.totalorder %s16, 1
    %p128 = por %p126, %p127
    %p129 = scmp.ne.s32.totalorder %s118, %s119
    %p130 = scmp.eq.s32.totalorder %s16, 0
    %p131 = por %p129, %p130
    %p132 = scmp.ne.s32.totalorder %s118, %s119
    %p133 = scmp.eq.s32.totalorder %s17, 1
    %p134 = por %p132, %p133
    %p136 = scmp.ne.s32.totalorder %s119, %s135
    %p137 = scmp.eq.s32.totalorder %s17, 0
    %p138 = por %p136, %p137
    %p139 = scmp.le.s32.totalorder 1, %s11
    %p140 = scmp.lt.s32.totalorder %s11, 3
    %p141 = pnand %p139, %p140
    %p142 = pneg %p141
    // Predicated region
    $region9: #{gat_forward.5} parent=5 // pred_check
      _
    $region10: #{gat_forward.5} parent=5 // pred_check_branch
      %144 = sbr.rel (%p141) target = $region12
    $region11: #{gat_forward.5} parent=5 // pred_region
      %s145 = ssub.s32 %s11, 1
      // Predicated region
      $region13: #{gat_forward.5} parent=11 // pred_check
        %p146 = pneg %p58
      $region14: #{gat_forward.5} parent=11 // pred_check_branch
        %148 = sbr.rel (%p146) target = $region16
      $region15: #{gat_forward.5} parent=11 // pred_region
        _
      $region16: #{gat_forward.5} parent=11 // pred_fallthru
        _
      // Predicated region
      $region17: #{gat_forward.5} parent=11 // pred_check
        %p149 = pneg %p79
      $region18: #{gat_forward.5} parent=11 // pred_check_branch
        %151 = sbr.rel (%p149) target = $region20
      $region19: #{gat_forward.5} parent=11 // pred_region
        _
      $region20: #{gat_forward.5} parent=11 // pred_fallthru
        _
    $region12: #{gat_forward.5} parent=5 // pred_fallthru
      _
    %p152 = scmp.lt.s32.totalorder %s11, 2
    // Predicated region
    $region21: #{gat_forward.5} parent=5 // pred_check
      %p153 = pneg %p152
    $region22: #{gat_forward.5} parent=5 // pred_check_branch
      %155 = sbr.rel (%p153) target = $region24
    $region23: #{gat_forward.5} parent=5 // pred_region
      // Predicated region
      $region25: #{gat_forward.5} parent=23 // pred_check
        %p156 = pneg %p31
      $region26: #{gat_forward.5} parent=23 // pred_check_branch
        %158 = sbr.rel (%p156) target = $region28
      $region27: #{gat_forward.5} parent=23 // pred_region
        %s159 = smul.u32 4, %s11
        %p160 = scmp.lt.s32.totalorder %s159, 7
        %s161 = scalar_select %p160, %s159, 7
        %s162 = smul.addr %s161, 8
        %s163 = scalar_lea.vmem %s0, %s162
        %s164 = smul.u32 4, %s11
      $region28: #{gat_forward.5} parent=23 // pred_fallthru
        _
    $region24: #{gat_forward.5} parent=5 // pred_fallthru
      _
    %p165 = scmp.le.s32.totalorder 1, %s11
    %p166 = scmp.lt.s32.totalorder %s11, 3
    %p167 = pnand %p165, %p166
    %p168 = pneg %p167
    // Predicated region
    $region29: #{gat_forward.5} parent=5 // pred_check
      _
    $region30: #{gat_forward.5} parent=5 // pred_check_branch
      %170 = sbr.rel (%p167) target = $region32
    $region31: #{gat_forward.5} parent=5 // pred_region
      %s171 = ssub.s32 %s11, 1
      %s172 = smul.u32 4, %s16
      %p173 = scmp.lt.s32.totalorder %s172, 7
      %s174 = scalar_select %p173, %s172, 7
      %s175 = smul.addr %s174, 8
      %s176 = scalar_lea.vmem %s0, %s175
      %p177 = pneg %p37
      %p178 = pneg %p34
      %p179 = pneg %p58
      %p180 = pneg %p55
      %p181 = pneg %p79
      %p182 = pneg %p76
      %p183 = pneg %p105
      %p184 = pneg %p102
      %s185 = smul.u32 4, %s16
      %p186 = scmp.lt.s32.totalorder %s185, 7
      %s187 = scalar_select %p186, %s185, 7
      %s188 = smul.addr %s187, 4
      %s189 = scalar_lea.vmem %s3, %s188
      %p190 = pneg %p131
      %p191 = pneg %p128
      %s192 = smul.u32 4, %s16
      %p193 = scmp.lt.s32.totalorder %s192, 7
      %s194 = scalar_select %p193, %s192, 7
      %s195 = smul.addr %s194, 8
      %s196 = scalar_lea.vmem %s4, %s195
      %s197 = smul.u32 4, %s16
      %p198 = scmp.lt.s32.totalorder %s197, 7
      %s199 = scalar_select %p198, %s197, 7
      %s200 = smul.addr %s199, 8
      %s201 = scalar_lea.vmem %s0, %s200
      %s202 = smul.u32 4, %s16
      %s203 = smul.u32 4, %s16
      %p204 = scmp.lt.s32.totalorder %s203, 7
      %s205 = scalar_select %p204, %s203, 7
      %s206 = smul.addr %s205, 4
      %s207 = scalar_lea.vmem %s3, %s206
      %s208 = smul.u32 4, %s16
      %s209 = smul.u32 4, %s16
      %p210 = scmp.lt.s32.totalorder %s209, 7
      %s211 = scalar_select %p210, %s209, 7
      %s212 = smul.addr %s211, 8
      %s213 = scalar_lea.vmem %s4, %s212
      %s214 = smul.u32 4, %s16
      %v216 = vld [vmem:[%s201] sm:$0xff]
      %v217 = vld [vmem:[%s201 + $0x8] sm:$0xff]
      %v218 = vld [vmem:[%s201 + $0x10] sm:$0xff]
      %v219 = vld [vmem:[%s201 + $0x18] sm:$0xff]
      %v220 = vpack.c.bf16 %v217, %v216
      %v221 = vpack.c.bf16 %v219, %v218
      %v222 = vld [vmem:[%s1] sm:$0xf]
      %vm223 = vcmask 64512
      %v225 = vsel %vm223, %v220, 0
      %v228 = vsel %vm223, %v221, 0
      %vm230 = vcmask 1043456
      %v232 = vsel %vm230, %v222, 0
      %234 = vmatprep.subr.bf16.mxu0 0
      %235 = vmatpush1.bf16.msra.mxu0 %v232
      %236 = vmatprep.subr.bf16.mxu0 0
      %237 = vmatpush1.bf16.msra.mxu0 0
      %238 = vmatprep.subr.bf16.mxu0 0
      %239 = vmatpush1.bf16.msra.mxu0 0
      %240 = vmatprep.subr.bf16.mxu0 0
      %241 = vmatpush1.bf16.msra.mxu0 0
      %242 = vmatprep.subr.bf16.mxu0 0
      %243 = vmatpush1.bf16.msra.mxu0 0
      %244 = vmatprep.subr.bf16.mxu0 0
      %245 = vmatpush1.bf16.msra.mxu0 0
      %246 = vmatprep.subr.bf16.mxu0 0
      %247 = vmatpush1.bf16.msra.mxu0 0
      %248 = vmatprep.subr.bf16.mxu0 0
      %249 = vmatpush1.bf16.msra.mxu0 0
      %250 = vmatprep.subr.bf16.mxu0 0
      %251 = vmatpush1.bf16.msra.mxu0 0
      %252 = vmatprep.subr.bf16.mxu0 0
      %253 = vmatpush1.bf16.msra.mxu0 0
      %254 = vmatprep.subr.bf16.mxu0 0
      %255 = vmatpush1.bf16.msra.mxu0 0
      %256 = vmatprep.subr.bf16.mxu0 0
      %257 = vmatpush1.bf16.msra.mxu0 0
      %258 = vmatprep.subr.bf16.mxu0 0
      %259 = vmatpush1.bf16.msra.mxu0 0
      %260 = vmatprep.subr.bf16.mxu0 0
      %261 = vmatpush1.bf16.msra.mxu0 0
      %262 = vmatprep.subr.bf16.mxu0 0
      %263 = vmatpush1.bf16.msra.mxu0 0
      %264 = vmatprep.subr.bf16.mxu0 0
      %265 = vmatpush1.bf16.msra.mxu0 0
      %266 = vmatprep.mubr.bf16.mxu0 0
      %267 = vmatmul.mubr.bf16.gmra.mrb[0].mxu0 %v225
      %v268 = vpop.f32.mrb[0].mxu0
      %v269 = vadd.f32 0.0, %v268
      %v270 = vpop.f32.mrb[0].mxu0
      %v271 = vpop.f32.mrb[0].mxu0
      %v272 = vadd.f32 0.0, %v271
      %v273 = vpop.f32.mrb[0].mxu0
      %274 = vmatprep.mubr.bf16.mxu0 0
      %275 = vmatmul.mubr.bf16.gmra.mrb[0].mxu0 %v228
      %v276 = vpop.f32.mrb[0].mxu0
      %v277 = vadd.f32 0.0, %v276
      %v278 = vpop.f32.mrb[0].mxu0
      %v279 = vpop.f32.mrb[0].mxu0
      %v280 = vadd.f32 0.0, %v279
      %v281 = vpop.f32.mrb[0].mxu0
      %282 = vdwg.mxu0
      %v283 = vpack.c.bf16 %v272, %v269
      %v284 = vpack.c.bf16 %v280, %v277
      %v285 = vld [vmem:[%s2] sm:$0xf]
      %v286 = vld [vmem:[%s2 + $0x4] sm:$0xf]
      %v287 = vld [vmem:[%s2 + $0x8] sm:$0xf]
      %v288 = vld [vmem:[%s2 + $0xc] sm:$0xf]
      %v293 = vunpack.c.l.b16 %v285
      %v294 = vunpack.c.l.b16 %v286
      %v295 = vunpack.c.l.b16 %v287
      %v296 = vunpack.c.l.b16 %v288
      %v297 = vpack.c.b16 %v294, %v293
      %v298 = vpack.c.b16 %v296, %v295
      %vm301 = vcmask 261120
      %v303 = vsel %vm301, %v283, 0
      %v306 = vsel %vm301, %v284, 0
      %308 = vmatprep.subr.bf16.mxu0 0
      %309 = vmatpush1.bf16.msra.mxu0 %v297
      %310 = vmatprep.subr.bf16.mxu0 0
      %311 = vmatpush1.bf16.msra.mxu0 %v298
      %312 = vmatprep.subr.bf16.mxu0 0
      %313 = vmatpush1.bf16.msra.mxu0 0
      %314 = vmatprep.subr.bf16.mxu0 0
      %315 = vmatpush1.bf16.msra.mxu0 0
      %316 = vmatprep.subr.bf16.mxu0 0
      %317 = vmatpush1.bf16.msra.mxu0 0
      %318 = vmatprep.subr.bf16.mxu0 0
      %319 = vmatpush1.bf16.msra.mxu0 0
      %320 = vmatprep.subr.bf16.mxu0 0
      %321 = vmatpush1.bf16.msra.mxu0 0
      %322 = vmatprep.subr.bf16.mxu0 0
      %323 = vmatpush1.bf16.msra.mxu0 0
      %324 = vmatprep.subr.bf16.mxu0 0
      %325 = vmatpush1.bf16.msra.mxu0 0
      %326 = vmatprep.subr.bf16.mxu0 0
      %327 = vmatpush1.bf16.msra.mxu0 0
      %328 = vmatprep.subr.bf16.mxu0 0
      %329 = vmatpush1.bf16.msra.mxu0 0
      %330 = vmatprep.subr.bf16.mxu0 0
      %331 = vmatpush1.bf16.msra.mxu0 0
      %332 = vmatprep.subr.bf16.mxu0 0
      %333 = vmatpush1.bf16.msra.mxu0 0
      %334 = vmatprep.subr.bf16.mxu0 0
      %335 = vmatpush1.bf16.msra.mxu0 0
      %336 = vmatprep.subr.bf16.mxu0 0
      %337 = vmatpush1.bf16.msra.mxu0 0
      %338 = vmatprep.subr.bf16.mxu0 0
      %339 = vmatpush1.bf16.msra.mxu0 0
      %340 = vmatprep.mubr.bf16.mxu0 0
      %341 = vmatmul.mubr.bf16.gmra.mrb[0].mxu0 %v303
      %v342 = vpop.f32.mrb[0].mxu0
      %v343 = vadd.f32 0.0, %v342
      %v344 = vpop.f32.mrb[0].mxu0
      %v345 = vpop.f32.mrb[0].mxu0
      %v346 = vadd.f32 0.0, %v345
      %v347 = vpop.f32.mrb[0].mxu0
      %348 = vmatprep.mubr.bf16.mxu0 0
      %349 = vmatmul.mubr.bf16.gmra.mrb[0].mxu0 %v306
      %v350 = vpop.f32.mrb[0].mxu0
      %v351 = vadd.f32 0.0, %v350
      %v352 = vpop.f32.mrb[0].mxu0
      %v353 = vpop.f32.mrb[0].mxu0
      %v354 = vadd.f32 0.0, %v353
      %v355 = vpop.f32.mrb[0].mxu0
      %356 = vdwg.mxu0
      %vm357 = vcmask 31744
      %358 = vst.msk [vmem:[%s213] sm:$0xff] %vm357, %v343
      %359 = vst.msk [vmem:[%s213 + $0x8] sm:$0xff] %vm357, %v346
      %360 = vst.msk [vmem:[%s213 + $0x10] sm:$0xff] %vm357, %v351
      %361 = vst.msk [vmem:[%s213 + $0x18] sm:$0xff] %vm357, %v354
      %v364 = vunpack.c.l.b16 %v283
      %v365 = vunpack.c.h.b16 %v283
      %v366 = vunpack.c.l.b16 %v284
      %v367 = vunpack.c.h.b16 %v284
      %v368 = vpack.c.b16 %v364, %v364
      %v369 = vpack.c.b16 %v365, %v365
      %v370 = vpack.c.b16 %v366, %v366
      %v371 = vpack.c.b16 %v367, %v367
      %vm376 = vcmask 257024
      %377 = vst.msk [vmem:[%s207] sm:$0xf] %vm376, %v368
      %378 = vst.msk [vmem:[%s207 + $0x4] sm:$0xf] %vm376, %v369
      %379 = vst.msk [vmem:[%s207 + $0x8] sm:$0xf] %vm376, %v370
      %380 = vst.msk [vmem:[%s207 + $0xc] sm:$0xf] %vm376, %v371
      %s381 = smul.u32 4, %s16
      %p382 = scmp.lt.s32.totalorder %s381, 7
      %s383 = scalar_select %p382, %s381, 7
      %s384 = smul.addr %s383, 4
      %s385 = scalar_lea.vmem %s3, %s384
      %s386 = smul.u32 4, %s16
      %p387 = scmp.lt.s32.totalorder %s386, 7
      %s388 = scalar_select %p387, %s386, 7
      %s389 = smul.addr %s388, 8
      %s390 = scalar_lea.vmem %s4, %s389
      // Predicated region
      $region33: #{gat_forward.5} parent=31 // pred_check
        %p391 = pneg %p102
      $region34: #{gat_forward.5} parent=31 // pred_check_branch
        %393 = sbr.rel (%p391) target = $region36
      $region35: #{gat_forward.5} parent=31 // pred_region
        %s394 = smul.u32 4, %s16
      $region36: #{gat_forward.5} parent=31 // pred_fallthru
        _
      // Predicated region
      $region37: #{gat_forward.5} parent=31 // pred_check
        %p395 = pneg %p128
      $region38: #{gat_forward.5} parent=31 // pred_check_branch
        %397 = sbr.rel (%p395) target = $region40
      $region39: #{gat_forward.5} parent=31 // pred_region
        %s398 = smul.u32 4, %s16
      $region40: #{gat_forward.5} parent=31 // pred_fallthru
        _
    $region32: #{gat_forward.5} parent=5 // pred_fallthru
      _
    %p399 = scmp.le.s32.totalorder 2, %s11
    // Predicated region
    $region41: #{gat_forward.5} parent=5 // pred_check
      %p400 = pneg %p399
    $region42: #{gat_forward.5} parent=5 // pred_check_branch
      %402 = sbr.rel (%p400) target = $region44
    $region43: #{gat_forward.5} parent=5 // pred_region
      %s403 = ssub.s32 %s11, 2
      // Predicated region
      $region45: #{gat_forward.5} parent=43 // pred_check
        %p404 = pneg %p108
      $region46: #{gat_forward.5} parent=43 // pred_check_branch
        %406 = sbr.rel (%p404) target = $region48
      $region47: #{gat_forward.5} parent=43 // pred_region
        %s407 = smul.u32 4, %s17
        %p408 = scmp.lt.s32.totalorder %s407, 7
        %s409 = scalar_select %p408, %s407, 7
        %s410 = smul.addr %s409, 4
        %s411 = scalar_lea.vmem %s3, %s410
      $region48: #{gat_forward.5} parent=43 // pred_fallthru
        _
      // Predicated region
      $region49: #{gat_forward.5} parent=43 // pred_check
        %p412 = pneg %p134
      $region50: #{gat_forward.5} parent=43 // pred_check_branch
        %414 = sbr.rel (%p412) target = $region52
      $region51: #{gat_forward.5} parent=43 // pred_region
        %s415 = smul.u32 4, %s17
        %p416 = scmp.lt.s32.totalorder %s415, 7
        %s417 = scalar_select %p416, %s415, 7
        %s418 = smul.addr %s417, 8
        %s419 = scalar_lea.vmem %s4, %s418
      $region52: #{gat_forward.5} parent=43 // pred_fallthru
        _
    $region44: #{gat_forward.5} parent=5 // pred_fallthru
      _
  $region6: #{gat_forward.5} parent=0 // loop_footer
    %s15 = sadd.s32 1, %s11
  $region7: #{gat_forward.5} parent=0 // loop_footer_branch
    %10 = sbr.rel target = $region3
  $region8: #{gat_forward.5} parent=0 // loop_exit
    _

// kernel: gat_forward.7
$region0: #{gat_forward.7}
  #allocation0 [shape = 'u32[]', space=smem, size = 0x4, offset = 0x4, fixed_abs, tag = 'smem constant byte address 0x4 - core index']
  #allocation1 [shape = 'u32[144,128]{1,0:T(1,128)}', space=vmem, size = 0x12000, scoped, tag = 'internal scratch']
  %s0 = inlined_call_operand.vmem [shape: f32[64,32], index: 0, kind: input, shape index: {}]
  %s1 = inlined_call_operand.vmem [shape: bf16[32,32], index: 1, kind: input, shape index: {}]
  %s2 = inlined_call_operand.vmem [shape: bf16[32,4], index: 2, kind: input, shape index: {}]
  %s3 = inlined_call_operand.vmem [shape: bf16[64,32], index: 3, kind: output, shape index: {0}]
  %s4 = inlined_call_operand.vmem [shape: f32[64,4], index: 4, kind: output, shape index: {1}]
  %5 = xla_tuple %s3, %s4
  %s6 = sld [smem:[#allocation0]]
  $region53: #{gat_forward.7} parent=0
    _
  %s8 = ssub.s32 1, %s6
  %s9 = scalar_select 0, %s8, %s6
  loop: start=0, step=1, limit=4
  $region2: #{gat_forward.7} parent=0 // loop_pre_header
    _
  $region3: #{gat_forward.7} parent=0 // loop_header
    %s11 = sphi 0, %s15
    %p12 = scmp.ge.s32.totalorder %s11, 4
    %s21 = sphi 0, %s23
    %s24 = sphi 0, %s21
    %s25 = sphi 0, %s24
    %s41 = sphi 0, %s25
    %s45 = sphi 0, %s45
    %s47 = sphi 0, %s45
    %s48 = sphi 0, %s47
    %s62 = sphi 0, %s48
    %s66 = sphi 0, %s66
    %s68 = sphi 0, %s66
    %s69 = sphi 0, %s68
    %s83 = sphi 0, %s69
    %s89 = sphi 0, %s91
    %s92 = sphi 0, %s89
    %s93 = sphi 0, %s92
    %s109 = sphi 0, %s93
    %s115 = sphi 0, %s117
    %s118 = sphi 0, %s115
    %s119 = sphi 0, %s118
    %s135 = sphi 0, %s119
  $region4: #{gat_forward.7} parent=0 // loop_header_branch
    %14 = sbr.rel (%p12) target = $region8
  $region5: #{gat_forward.7} parent=0 // loop_body
    %s16 = ssub.s32 %s11, 1
    %s17 = ssub.s32 %s11, 2
    %s18 = sadd.s32 %s11, 1
    %s19 = ssub.s32 %s11, %s18
    %p20 = scmp.eq.s32.totalorder %s19, 0
    %s22 = sadd.s32 %s21, 1
    %s23 = scalar_select %p20, %s21, %s22
    %p26 = pneg %p20
    %p27 = scmp.eq.s32.totalorder %s11, 1
    %p28 = por %p26, %p27
    %p29 = scmp.ne.s32.totalorder %s21, %s24
    %p30 = scmp.eq.s32.totalorder %s11, 0
    %p31 = por %p29, %p30
    %p32 = scmp.ne.s32.totalorder %s21, %s24
    %p33 = scmp.eq.s32.totalorder %s16, 1
    %p34 = por %p32, %p33
    %p35 = scmp.ne.s32.totalorder %s24, %s25
    %p36 = scmp.eq.s32.totalorder %s16, 0
    %p37 = por %p35, %p36
    %p38 = scmp.ne.s32.totalorder %s24, %s25
    %p39 = scmp.eq.s32.totalorder %s17, 1
    %p40 = por %p38, %p39
    %p42 = scmp.ne.s32.totalorder %s25, %s41
    %p43 = scmp.eq.s32.totalorder %s17, 0
    %p44 = por %p42, %p43
    %s46 = sadd.s32 %s45, 1
    %p49 = scmp.eq.s32.totalorder %s11, 1
    %p50 = scmp.ne.s32.totalorder %s45, %s47
    %p51 = scmp.eq.s32.totalorder %s11, 0
    %p52 = por %p50, %p51
    %p53 = scmp.ne.s32.totalorder %s45, %s47
    %p54 = scmp.eq.s32.totalorder %s16, 1
    %p55 = por %p53, %p54
    %p56 = scmp.ne.s32.totalorder %s47, %s48
    %p57 = scmp.eq.s32.totalorder %s16, 0
    %p58 = por %p56, %p57
    %p59 = scmp.ne.s32.totalorder %s47, %s48
    %p60 = scmp.eq.s32.totalorder %s17, 1
    %p61 = por %p59, %p60
    %p63 = scmp.ne.s32.totalorder %s48, %s62
    %p64 = scmp.eq.s32.totalorder %s17, 0
    %p65 = por %p63, %p64
    %s67 = sadd.s32 %s66, 1
    %p70 = scmp.eq.s32.totalorder %s11, 1
    %p71 = scmp.ne.s32.totalorder %s66, %s68
    %p72 = scmp.eq.s32.totalorder %s11, 0
    %p73 = por %p71, %p72
    %p74 = scmp.ne.s32.totalorder %s66, %s68
    %p75 = scmp.eq.s32.totalorder %s16, 1
    %p76 = por %p74, %p75
    %p77 = scmp.ne.s32.totalorder %s68, %s69
    %p78 = scmp.eq.s32.totalorder %s16, 0
    %p79 = por %p77, %p78
    %p80 = scmp.ne.s32.totalorder %s68, %s69
    %p81 = scmp.eq.s32.totalorder %s17, 1
    %p82 = por %p80, %p81
    %p84 = scmp.ne.s32.totalorder %s69, %s83
    %p85 = scmp.eq.s32.totalorder %s17, 0
    %p86 = por %p84, %p85
    %s87 = ssub.s32 %s11, %s18
    %p88 = scmp.eq.s32.totalorder %s87, 0
    %s90 = sadd.s32 %s89, 1
    %s91 = scalar_select %p88, %s89, %s90
    %p94 = pneg %p88
    %p95 = scmp.eq.s32.totalorder %s11, 1
    %p96 = por %p94, %p95
    %p97 = scmp.ne.s32.totalorder %s89, %s92
    %p98 = scmp.eq.s32.totalorder %s11, 0
    %p99 = por %p97, %p98
    %p100 = scmp.ne.s32.totalorder %s89, %s92
    %p101 = scmp.eq.s32.totalorder %s16, 1
    %p102 = por %p100, %p101
    %p103 = scmp.ne.s32.totalorder %s92, %s93
    %p104 = scmp.eq.s32.totalorder %s16, 0
    %p105 = por %p103, %p104
    %p106 = scmp.ne.s32.totalorder %s92, %s93
    %p107 = scmp.eq.s32.totalorder %s17, 1
    %p108 = por %p106, %p107
    %p110 = scmp.ne.s32.totalorder %s93, %s109
    %p111 = scmp.eq.s32.totalorder %s17, 0
    %p112 = por %p110, %p111
    %s113 = ssub.s32 %s11, %s18
    %p114 = scmp.eq.s32.totalorder %s113, 0
    %s116 = sadd.s32 %s115, 1
    %s117 = scalar_select %p114, %s115, %s116
    %p120 = pneg %p114
    %p121 = scmp.eq.s32.totalorder %s11, 1
    %p122 = por %p120, %p121
    %p123 = scmp.ne.s32.totalorder %s115, %s118
    %p124 = scmp.eq.s32.totalorder %s11, 0
    %p125 = por %p123, %p124
    %p126 = scmp.ne.s32.totalorder %s115, %s118
    %p127 = scmp.eq.s32.totalorder %s16, 1
    %p128 = por %p126, %p127
    %p129 = scmp.ne.s32.totalorder %s118, %s119
    %p130 = scmp.eq.s32.totalorder %s16, 0
    %p131 = por %p129, %p130
    %p132 = scmp.ne.s32.totalorder %s118, %s119
    %p133 = scmp.eq.s32.totalorder %s17, 1
    %p134 = por %p132, %p133
    %p136 = scmp.ne.s32.totalorder %s119, %s135
    %p137 = scmp.eq.s32.totalorder %s17, 0
    %p138 = por %p136, %p137
    %p139 = scmp.le.s32.totalorder 1, %s11
    %p140 = scmp.lt.s32.totalorder %s11, 3
    %p141 = pnand %p139, %p140
    %p142 = pneg %p141
    // Predicated region
    $region9: #{gat_forward.7} parent=5 // pred_check
      _
    $region10: #{gat_forward.7} parent=5 // pred_check_branch
      %144 = sbr.rel (%p141) target = $region12
    $region11: #{gat_forward.7} parent=5 // pred_region
      %s145 = ssub.s32 %s11, 1
      // Predicated region
      $region13: #{gat_forward.7} parent=11 // pred_check
        %p146 = pneg %p58
      $region14: #{gat_forward.7} parent=11 // pred_check_branch
        %148 = sbr.rel (%p146) target = $region16
      $region15: #{gat_forward.7} parent=11 // pred_region
        _
      $region16: #{gat_forward.7} parent=11 // pred_fallthru
        _
      // Predicated region
      $region17: #{gat_forward.7} parent=11 // pred_check
        %p149 = pneg %p79
      $region18: #{gat_forward.7} parent=11 // pred_check_branch
        %151 = sbr.rel (%p149) target = $region20
      $region19: #{gat_forward.7} parent=11 // pred_region
        _
      $region20: #{gat_forward.7} parent=11 // pred_fallthru
        _
    $region12: #{gat_forward.7} parent=5 // pred_fallthru
      _
    %p152 = scmp.lt.s32.totalorder %s11, 2
    // Predicated region
    $region21: #{gat_forward.7} parent=5 // pred_check
      %p153 = pneg %p152
    $region22: #{gat_forward.7} parent=5 // pred_check_branch
      %155 = sbr.rel (%p153) target = $region24
    $region23: #{gat_forward.7} parent=5 // pred_region
      // Predicated region
      $region25: #{gat_forward.7} parent=23 // pred_check
        %p156 = pneg %p31
      $region26: #{gat_forward.7} parent=23 // pred_check_branch
        %158 = sbr.rel (%p156) target = $region28
      $region27: #{gat_forward.7} parent=23 // pred_region
        %s159 = smul.u32 4, %s11
        %p160 = scmp.lt.s32.totalorder %s159, 7
        %s161 = scalar_select %p160, %s159, 7
        %s162 = smul.addr %s161, 8
        %s163 = scalar_lea.vmem %s0, %s162
        %s164 = smul.u32 4, %s11
      $region28: #{gat_forward.7} parent=23 // pred_fallthru
        _
    $region24: #{gat_forward.7} parent=5 // pred_fallthru
      _
    %p165 = scmp.le.s32.totalorder 1, %s11
    %p166 = scmp.lt.s32.totalorder %s11, 3
    %p167 = pnand %p165, %p166
    %p168 = pneg %p167
    // Predicated region
    $region29: #{gat_forward.7} parent=5 // pred_check
      _
    $region30: #{gat_forward.7} parent=5 // pred_check_branch
      %170 = sbr.rel (%p167) target = $region32
    $region31: #{gat_forward.7} parent=5 // pred_region
      %s171 = ssub.s32 %s11, 1
      %s172 = smul.u32 4, %s16
      %p173 = scmp.lt.s32.totalorder %s172, 7
      %s174 = scalar_select %p173, %s172, 7
      %s175 = smul.addr %s174, 8
      %s176 = scalar_lea.vmem %s0, %s175
      %p177 = pneg %p37
      %p178 = pneg %p34
      %p179 = pneg %p58
      %p180 = pneg %p55
      %p181 = pneg %p79
      %p182 = pneg %p76
      %p183 = pneg %p105
      %p184 = pneg %p102
      %s185 = smul.u32 4, %s16
      %p186 = scmp.lt.s32.totalorder %s185, 7
      %s187 = scalar_select %p186, %s185, 7
      %s188 = smul.addr %s187, 4
      %s189 = scalar_lea.vmem %s3, %s188
      %p190 = pneg %p131
      %p191 = pneg %p128
      %s192 = smul.u32 4, %s16
      %p193 = scmp.lt.s32.totalorder %s192, 7
      %s194 = scalar_select %p193, %s192, 7
      %s195 = smul.addr %s194, 8
      %s196 = scalar_lea.vmem %s4, %s195
      %s197 = smul.u32 4, %s16
      %p198 = scmp.lt.s32.totalorder %s197, 7
      %s199 = scalar_select %p198, %s197, 7
      %s200 = smul.addr %s199, 8
      %s201 = scalar_lea.vmem %s0, %s200
      %s202 = smul.u32 4, %s16
      %s203 = smul.u32 4, %s16
      %p204 = scmp.lt.s32.totalorder %s203, 7
      %s205 = scalar_select %p204, %s203, 7
      %s206 = smul.addr %s205, 4
      %s207 = scalar_lea.vmem %s3, %s206
      %s208 = smul.u32 4, %s16
      %s209 = smul.u32 4, %s16
      %p210 = scmp.lt.s32.totalorder %s209, 7
      %s211 = scalar_select %p210, %s209, 7
      %s212 = smul.addr %s211, 8
      %s213 = scalar_lea.vmem %s4, %s212
      %s214 = smul.u32 4, %s16
      %v216 = vld [vmem:[%s201] sm:$0xff]
      %v217 = vld [vmem:[%s201 + $0x8] sm:$0xff]
      %v218 = vld [vmem:[%s201 + $0x10] sm:$0xff]
      %v219 = vld [vmem:[%s201 + $0x18] sm:$0xff]
      %v220 = vpack.c.bf16 %v217, %v216
      %v221 = vpack.c.bf16 %v219, %v218
      %v222 = vld [vmem:[%s1] sm:$0xf]
      %v223 = vld [vmem:[%s1 + $0x4] sm:$0xf]
      %v224 = vld [vmem:[%s1 + $0x8] sm:$0xf]
      %v225 = vld [vmem:[%s1 + $0xc] sm:$0xf]
      %v230 = vunpack.c.l.b16 %v222
      %v231 = vunpack.c.l.b16 %v223
      %v232 = vunpack.c.l.b16 %v224
      %v233 = vunpack.c.l.b16 %v225
      %v234 = vpack.c.b16 %v231, %v230
      %v235 = vpack.c.b16 %v233, %v232
      %vm238 = vcmask 261120
      %v240 = vsel %vm238, %v220, 0
      %v243 = vsel %vm238, %v221, 0
      %245 = vmatprep.subr.bf16.mxu0 0
      %246 = vmatpush1.bf16.msra.mxu0 %v234
      %247 = vmatprep.subr.bf16.mxu0 0
      %248 = vmatpush1.bf16.msra.mxu0 %v235
      %249 = vmatprep.subr.bf16.mxu0 0
      %250 = vmatpush1.bf16.msra.mxu0 0
      %251 = vmatprep.subr.bf16.mxu0 0
      %252 = vmatpush1.bf16.msra.mxu0 0
      %253 = vmatprep.subr.bf16.mxu0 0
      %254 = vmatpush1.bf16.msra.mxu0 0
      %255 = vmatprep.subr.bf16.mxu0 0
      %256 = vmatpush1.bf16.msra.mxu0 0
      %257 = vmatprep.subr.bf16.mxu0 0
      %258 = vmatpush1.bf16.msra.mxu0 0
      %259 = vmatprep.subr.bf16.mxu0 0
      %260 = vmatpush1.bf16.msra.mxu0 0
      %261 = vmatprep.subr.bf16.mxu0 0
      %262 = vmatpush1.bf16.msra.mxu0 0
      %263 = vmatprep.subr.bf16.mxu0 0
      %264 = vmatpush1.bf16.msra.mxu0 0
      %265 = vmatprep.subr.bf16.mxu0 0
      %266 = vmatpush1.bf16.msra.mxu0 0
      %267 = vmatprep.subr.bf16.mxu0 0
      %268 = vmatpush1.bf16.msra.mxu0 0
      %269 = vmatprep.subr.bf16.mxu0 0
      %270 = vmatpush1.bf16.msra.mxu0 0
      %271 = vmatprep.subr.bf16.mxu0 0
      %272 = vmatpush1.bf16.msra.mxu0 0
      %273 = vmatprep.subr.bf16.mxu0 0
      %274 = vmatpush1.bf16.msra.mxu0 0
      %275 = vmatprep.subr.bf16.mxu0 0
      %276 = vmatpush1.bf16.msra.mxu0 0
      %277 = vmatprep.mubr.bf16.mxu0 0
      %278 = vmatmul.mubr.bf16.gmra.mrb[0].mxu0 %v240
      %v279 = vpop.f32.mrb[0].mxu0
      %v280 = vadd.f32 0.0, %v279
      %v281 = vpop.f32.mrb[0].mxu0
      %v282 = vpop.f32.mrb[0].mxu0
      %v283 = vadd.f32 0.0, %v282
      %v284 = vpop.f32.mrb[0].mxu0
      %285 = vmatprep.mubr.bf16.mxu0 0
      %286 = vmatmul.mubr.bf16.gmra.mrb[0].mxu0 %v243
      %v287 = vpop.f32.mrb[0].mxu0
      %v288 = vadd.f32 0.0, %v287
      %v289 = vpop.f32.mrb[0].mxu0
      %v290 = vpop.f32.mrb[0].mxu0
      %v291 = vadd.f32 0.0, %v290
      %v292 = vpop.f32.mrb[0].mxu0
      %293 = vdwg.mxu0
      %v294 = vpack.c.bf16 %v283, %v280
      %v295 = vpack.c.bf16 %v291, %v288
      %v296 = vld [vmem:[%s2] sm:$0xf]
      %v297 = vld [vmem:[%s2 + $0x4] sm:$0xf]
      %v298 = vld [vmem:[%s2 + $0x8] sm:$0xf]
      %v299 = vld [vmem:[%s2 + $0xc] sm:$0xf]
      %v304 = vunpack.c.l.b16 %v296
      %v305 = vunpack.c.l.b16 %v297
      %v306 = vunpack.c.l.b16 %v298
      %v307 = vunpack.c.l.b16 %v299
      %v308 = vpack.c.b16 %v305, %v304
      %v309 = vpack.c.b16 %v307, %v306
      %v313 = vsel %vm238, %v294, 0
      %v316 = vsel %vm238, %v295, 0
      %318 = vmatprep.subr.bf16.mxu0 0
      %319 = vmatpush1.bf16.msra.mxu0 %v308
      %320 = vmatprep.subr.bf16.mxu0 0
      %321 = vmatpush1.bf16.msra.mxu0 %v309
      %322 = vmatprep.subr.bf16.mxu0 0
      %323 = vmatpush1.bf16.msra.mxu0 0
      %324 = vmatprep.subr.bf16.mxu0 0
      %325 = vmatpush1.bf16.msra.mxu0 0
      %326 = vmatprep.subr.bf16.mxu0 0
      %327 = vmatpush1.bf16.msra.mxu0 0
      %328 = vmatprep.subr.bf16.mxu0 0
      %329 = vmatpush1.bf16.msra.mxu0 0
      %330 = vmatprep.subr.bf16.mxu0 0
      %331 = vmatpush1.bf16.msra.mxu0 0
      %332 = vmatprep.subr.bf16.mxu0 0
      %333 = vmatpush1.bf16.msra.mxu0 0
      %334 = vmatprep.subr.bf16.mxu0 0
      %335 = vmatpush1.bf16.msra.mxu0 0
      %336 = vmatprep.subr.bf16.mxu0 0
      %337 = vmatpush1.bf16.msra.mxu0 0
      %338 = vmatprep.subr.bf16.mxu0 0
      %339 = vmatpush1.bf16.msra.mxu0 0
      %340 = vmatprep.subr.bf16.mxu0 0
      %341 = vmatpush1.bf16.msra.mxu0 0
      %342 = vmatprep.subr.bf16.mxu0 0
      %343 = vmatpush1.bf16.msra.mxu0 0
      %344 = vmatprep.subr.bf16.mxu0 0
      %345 = vmatpush1.bf16.msra.mxu0 0
      %346 = vmatprep.subr.bf16.mxu0 0
      %347 = vmatpush1.bf16.msra.mxu0 0
      %348 = vmatprep.subr.bf16.mxu0 0
      %349 = vmatpush1.bf16.msra.mxu0 0
      %350 = vmatprep.mubr.bf16.mxu0 0
      %351 = vmatmul.mubr.bf16.gmra.mrb[0].mxu0 %v313
      %v352 = vpop.f32.mrb[0].mxu0
      %v353 = vadd.f32 0.0, %v352
      %v354 = vpop.f32.mrb[0].mxu0
      %v355 = vpop.f32.mrb[0].mxu0
      %v356 = vadd.f32 0.0, %v355
      %v357 = vpop.f32.mrb[0].mxu0
      %358 = vmatprep.mubr.bf16.mxu0 0
      %359 = vmatmul.mubr.bf16.gmra.mrb[0].mxu0 %v316
      %v360 = vpop.f32.mrb[0].mxu0
      %v361 = vadd.f32 0.0, %v360
      %v362 = vpop.f32.mrb[0].mxu0
      %v363 = vpop.f32.mrb[0].mxu0
      %v364 = vadd.f32 0.0, %v363
      %v365 = vpop.f32.mrb[0].mxu0
      %366 = vdwg.mxu0
      %vm367 = vcmask 31744
      %368 = vst.msk [vmem:[%s213] sm:$0xff] %vm367, %v353
      %369 = vst.msk [vmem:[%s213 + $0x8] sm:$0xff] %vm367, %v356
      %370 = vst.msk [vmem:[%s213 + $0x10] sm:$0xff] %vm367, %v361
      %371 = vst.msk [vmem:[%s213 + $0x18] sm:$0xff] %vm367, %v364
      %v374 = vunpack.c.l.b16 %v294
      %v375 = vunpack.c.h.b16 %v294
      %v376 = vunpack.c.l.b16 %v295
      %v377 = vunpack.c.h.b16 %v295
      %v378 = vpack.c.b16 %v374, %v374
      %v379 = vpack.c.b16 %v375, %v375
      %v380 = vpack.c.b16 %v376, %v376
      %v381 = vpack.c.b16 %v377, %v377
      %vm386 = vcmask 257024
      %387 = vst.msk [vmem:[%s207] sm:$0xf] %vm386, %v378
      %388 = vst.msk [vmem:[%s207 + $0x4] sm:$0xf] %vm386, %v379
      %389 = vst.msk [vmem:[%s207 + $0x8] sm:$0xf] %vm386, %v380
      %390 = vst.msk [vmem:[%s207 + $0xc] sm:$0xf] %vm386, %v381
      %s391 = smul.u32 4, %s16
      %p392 = scmp.lt.s32.totalorder %s391, 7
      %s393 = scalar_select %p392, %s391, 7
      %s394 = smul.addr %s393, 4
      %s395 = scalar_lea.vmem %s3, %s394
      %s396 = smul.u32 4, %s16
      %p397 = scmp.lt.s32.totalorder %s396, 7
      %s398 = scalar_select %p397, %s396, 7
      %s399 = smul.addr %s398, 8
      %s400 = scalar_lea.vmem %s4, %s399
      // Predicated region
      $region33: #{gat_forward.7} parent=31 // pred_check
        %p401 = pneg %p102
      $region34: #{gat_forward.7} parent=31 // pred_check_branch
        %403 = sbr.rel (%p401) target = $region36
      $region35: #{gat_forward.7} parent=31 // pred_region
        %s404 = smul.u32 4, %s16
      $region36: #{gat_forward.7} parent=31 // pred_fallthru
        _
      // Predicated region
      $region37: #{gat_forward.7} parent=31 // pred_check
        %p405 = pneg %p128
      $region38: #{gat_forward.7} parent=31 // pred_check_branch
        %407 = sbr.rel (%p405) target = $region40
      $region39: #{gat_forward.7} parent=31 // pred_region
        %s408 = smul.u32 4, %s16
      $region40: #{gat_forward.7} parent=31 // pred_fallthru
        _
    $region32: #{gat_forward.7} parent=5 // pred_fallthru
      _
    %p409 = scmp.le.s32.totalorder 2, %s11
    // Predicated region
    $region41: #{gat_forward.7} parent=5 // pred_check
      %p410 = pneg %p409
    $region42: #{gat_forward.7} parent=5 // pred_check_branch
      %412 = sbr.rel (%p410) target = $region44
    $region43: #{gat_forward.7} parent=5 // pred_region
      %s413 = ssub.s32 %s11, 2
      // Predicated region
      $region45: #{gat_forward.7} parent=43 // pred_check
        %p414 = pneg %p108
      $region46: #{gat_forward.7} parent=43 // pred_check_branch
        %416 = sbr.rel (%p414) target = $region48
      $region47: #{gat_forward.7} parent=43 // pred_region
        %s417 = smul.u32 4, %s17
        %p418 = scmp.lt.s32.totalorder %s417, 7
        %s419 = scalar_select %p418, %s417, 7
        %s420 = smul.addr %s419, 4
        %s421 = scalar_lea.vmem %s3, %s420
      $region48: #{gat_forward.7} parent=43 // pred_fallthru
        _
      // Predicated region
      $region49: #{gat_forward.7} parent=43 // pred_check
        %p422 = pneg %p134
      $region50: #{gat_forward.7} parent=43 // pred_check_branch
        %424 = sbr.rel (%p422) target = $region52
      $region51: #{gat_forward.7} parent=43 // pred_region
        %s425 = smul.u32 4, %s17
        %p426 = scmp.lt.s32.totalorder %s425, 7
        %s427 = scalar_select %p426, %s425, 7
        %s428 = smul.addr %s427, 8
        %s429 = scalar_lea.vmem %s4, %s428
      $region52: #{gat_forward.7} parent=43 // pred_fallthru
        _
    $region44: #{gat_forward.7} parent=5 // pred_fallthru
      _
  $region6: #{gat_forward.7} parent=0 // loop_footer
    %s15 = sadd.s32 1, %s11
  $region7: #{gat_forward.7} parent=0 // loop_footer_branch
    %10 = sbr.rel target = $region3
  $region8: #{gat_forward.7} parent=0 // loop_exit
    _

// kernel: gat_forward.9
$region0: #{gat_forward.9}
  #allocation0 [shape = 'u32[]', space=smem, size = 0x4, offset = 0x4, fixed_abs, tag = 'smem constant byte address 0x4 - core index']
  #allocation1 [shape = 'u32[144,128]{1,0:T(1,128)}', space=vmem, size = 0x12000, scoped, tag = 'internal scratch']
  %s0 = inlined_call_operand.vmem [shape: f32[64,32], index: 0, kind: input, shape index: {}]
  %s1 = inlined_call_operand.vmem [shape: f32[32,4], index: 1, kind: input, shape index: {}]
  %s2 = inlined_call_operand.vmem [shape: f32[1,4], index: 2, kind: input, shape index: {}]
  %s3 = inlined_call_operand.hbm [shape: f32[1,4], index: 3, kind: output, shape index: {0}]
  %s4 = inlined_call_operand.hbm [shape: f32[1,32], index: 4, kind: output, shape index: {1}]
  %5 = xla_tuple %s3, %s4
  %s6 = sld [smem:[#allocation0]]
  $region30: #{gat_forward.9} parent=0
    _
  %s8 = ssub.s32 1, %s6
  %s9 = scalar_select 0, %s8, %s6
  $region1: #{gat_forward.9} parent=0
    #allocation2 [shape = 'u8[512]{0}', space=vmem, size = 0x400, scoped, tag = 'output window, operand 0, single buffered']
    #allocation3 [shape = 's32[1]{0}', space=sflag, size = 0x4, scoped, tag = 'scoped memory for gat_forward.9']
    #allocation4 [shape = 'u8[512]{0}', space=vmem, size = 0x400, scoped, tag = 'output window, operand 1, single buffered']
    #allocation5 [shape = 's32[1]{0}', space=sflag, size = 0x4, scoped, tag = 'scoped memory for gat_forward.9']
    %10 = vsyncpa [#allocation3], 0
    %11 = vsyncpa [#allocation5], 0
    // Predicated region
    $region2: #{gat_forward.9} parent=1 // pred_check
      _
    $region3: #{gat_forward.9} parent=1 // pred_check_branch
      %13 = sbr.rel (0) target = $region5
    $region4: #{gat_forward.9} parent=1 // pred_region
      _
    $region5: #{gat_forward.9} parent=1 // pred_fallthru
      _
    // Predicated region
    $region6: #{gat_forward.9} parent=1 // pred_check
      _
    $region7: #{gat_forward.9} parent=1 // pred_check_branch
      %15 = sbr.rel (0) target = $region9
    $region8: #{gat_forward.9} parent=1 // pred_region
      _
    $region9: #{gat_forward.9} parent=1 // pred_fallthru
      _
    // Predicated region
    $region10: #{gat_forward.9} parent=1 // pred_check
      _
    $region11: #{gat_forward.9} parent=1 // pred_check_branch
      %17 = sbr.rel (0) target = $region13
    $region12: #{gat_forward.9} parent=1 // pred_region
      _
    $region13: #{gat_forward.9} parent=1 // pred_fallthru
      _
    %v18 = vlaneseq
    %v19 = vshrl.u32 %v18, 7
    %v20 = vadd.s32 %v19, 8
    %v21 = vadd.s32 %v19, 16
    %v22 = vadd.s32 %v19, 24
    %v23 = vadd.s32 %v19, 32
    %v24 = vadd.s32 %v19, 40
    %v25 = vadd.s32 %v19, 48
    %v26 = vadd.s32 %v19, 56
    %vm27 = vcmp.lt.s32.totalorder %v19, 64
    %vm28 = vcmp.lt.s32.totalorder %v20, 64
    %vm29 = vcmp.lt.s32.totalorder %v21, 64
    %vm30 = vcmp.lt.s32.totalorder %v22, 64
    %vm31 = vcmp.lt.s32.totalorder %v23, 64
    %vm32 = vcmp.lt.s32.totalorder %v24, 64
    %vm33 = vcmp.lt.s32.totalorder %v25, 64
    %vm34 = vcmp.lt.s32.totalorder %v26, 64
    %v35 = vld [vmem:[%s0] sm:$0xff]
    %v36 = vld [vmem:[%s0 + $0x8] sm:$0xff]
    %v37 = vld [vmem:[%s0 + $0x10] sm:$0xff]
    %v38 = vld [vmem:[%s0 + $0x18] sm:$0xff]
    %v39 = vld [vmem:[%s0 + $0x20] sm:$0xff]
    %v40 = vld [vmem:[%s0 + $0x28] sm:$0xff]
    %v41 = vld [vmem:[%s0 + $0x30] sm:$0xff]
    %v42 = vld [vmem:[%s0 + $0x38] sm:$0xff]
    %v43 = vsel %vm27, 1, 0
    %v44 = vsel %vm28, 1, 0
    %v45 = vsel %vm29, 1, 0
    %v46 = vsel %vm30, 1, 0
    %v47 = vsel %vm31, 1, 0
    %v48 = vsel %vm32, 1, 0
    %v49 = vsel %vm33, 1, 0
    %v50 = vsel %vm34, 1, 0
    %vm51 = vcmp.eq.s32.totalorder %v43, 1
    %vm52 = vcmp.eq.s32.totalorder %v44, 1
    %vm53 = vcmp.eq.s32.totalorder %v45, 1
    %vm54 = vcmp.eq.s32.totalorder %v46, 1
    %vm55 = vcmp.eq.s32.totalorder %v47, 1
    %vm56 = vcmp.eq.s32.totalorder %v48, 1
    %vm57 = vcmp.eq.s32.totalorder %v49, 1
    %vm58 = vcmp.eq.s32.totalorder %v50, 1
    %v59 = vsel %vm51, %v35, -inf
    %v60 = vsel %vm52, %v36, -inf
    %v61 = vsel %vm53, %v37, -inf
    %v62 = vsel %vm54, %v38, -inf
    %v63 = vsel %vm55, %v39, -inf
    %v64 = vsel %vm56, %v40, -inf
    %v65 = vsel %vm57, %v41, -inf
    %v66 = vsel %vm58, %v42, -inf
    %vm67 = vcmask 261120
    %v68 = vsel %vm67, %v59, -inf
    %v69 = vsel %vm67, %v60, -inf
    %v70 = vsel %vm67, %v61, -inf
    %v71 = vsel %vm67, %v62, -inf
    %v72 = vsel %vm67, %v63, -inf
    %v73 = vmax.f32 %v68, %v72
    %v74 = vsel %vm67, %v64, -inf
    %v75 = vmax.f32 %v69, %v74
    %v76 = vsel %vm67, %v65, -inf
    %v77 = vmax.f32 %v70, %v76
    %v78 = vsel %vm67, %v66, -inf
    %v79 = vmax.f32 %v71, %v78
    %v80 = vmax.f32 %v73, %v75
    %v81 = vmax.f32 %v77, %v79
    %v82 = vmax.f32 %v80, %v81
    %v83 = vrot.slane %v82, 4
    %v84 = vmax.f32 %v82, %v83
    %v85 = vrot.slane %v84, 2
    %v86 = vmax.f32 %v84, %v85
    %v87 = vrot.slane %v86, 1
    %v88 = vmax.f32 %v86, %v87
    %vm89 = vcmask 253952
    %90 = vst.msk [vmem:[#allocation4] sm:$0x1] %vm89, %v88
    %v91 = vld [vmem:[%s1] sm:$0xff]
    %v92 = vld [vmem:[%s1 + $0x8] sm:$0xff]
    %v93 = vld [vmem:[%s1 + $0x10] sm:$0xff]
    %v94 = vld [vmem:[%s1 + $0x18] sm:$0xff]
    %v95 = vld [vmem:[%s2] sm:$0x1]
    %v97 = vsel %vm67, %v88, 0
    %99 = vmatprep.subr.mxu0 0.0
    %100 = vmatpush1.msra.mxu0 %v91
    %101 = vmatprep.subr.mxu0 0.0
    %102 = vmatpush1.msra.mxu0 %v92
    %103 = vmatprep.subr.mxu0 0.0
    %104 = vmatpush1.msra.mxu0 %v93
    %105 = vmatprep.subr.mxu0 0.0
    %106 = vmatpush1.msra.mxu0 %v94
    %107 = vmatprep.subr.mxu0 0.0
    %108 = vmatpush1.msra.mxu0 0.0
    %109 = vmatprep.subr.mxu0 0.0
    %110 = vmatpush1.msra.mxu0 0.0
    %111 = vmatprep.subr.mxu0 0.0
    %112 = vmatpush1.msra.mxu0 0.0
    %113 = vmatprep.subr.mxu0 0.0
    %114 = vmatpush1.msra.mxu0 0.0
    %115 = vmatprep.subr.mxu0 0.0
    %116 = vmatpush1.msra.mxu0 0.0
    %117 = vmatprep.subr.mxu0 0.0
    %118 = vmatpush1.msra.mxu0 0.0
    %119 = vmatprep.subr.mxu0 0.0
    %120 = vmatpush1.msra.mxu0 0.0
    %121 = vmatprep.subr.mxu0 0.0
    %122 = vmatpush1.msra.mxu0 0.0
    %123 = vmatprep.subr.mxu0 0.0
    %124 = vmatpush1.msra.mxu0 0.0
    %125 = vmatprep.subr.mxu0 0.0
    %126 = vmatpush1.msra.mxu0 0.0
    %127 = vmatprep.subr.mxu0 0.0
    %128 = vmatpush1.msra.mxu0 0.0
    %129 = vmatprep.subr.mxu0 0.0
    %130 = vmatpush1.msra.mxu0 0.0
    %131 = vmatprep.subr.mxu0 0.0
    %132 = vmatpush1.msra.mxu0 0.0
    %133 = vmatprep.subr.mxu0 0.0
    %134 = vmatpush1.msra.mxu0 0.0
    %135 = vmatprep.subr.mxu0 0.0
    %136 = vmatpush1.msra.mxu0 0.0
    %137 = vmatprep.subr.mxu0 0.0
    %138 = vmatpush1.msra.mxu0 0.0
    %139 = vmatprep.subr.mxu0 0.0
    %140 = vmatpush1.msra.mxu0 0.0
    %141 = vmatprep.subr.mxu0 0.0
    %142 = vmatpush1.msra.mxu0 0.0
    %143 = vmatprep.subr.mxu0 0.0
    %144 = vmatpush1.msra.mxu0 0.0
    %145 = vmatprep.subr.mxu0 0.0
    %146 = vmatpush1.msra.mxu0 0.0
    %147 = vmatprep.subr.mxu0 0.0
    %148 = vmatpush1.msra.mxu0 0.0
    %149 = vmatprep.subr.mxu0 0.0
    %150 = vmatpush1.msra.mxu0 0.0
    %151 = vmatprep.subr.mxu0 0.0
    %152 = vmatpush1.msra.mxu0 0.0
    %153 = vmatprep.subr.mxu0 0.0
    %154 = vmatpush1.msra.mxu0 0.0
    %155 = vmatprep.subr.mxu0 0.0
    %156 = vmatpush1.msra.mxu0 0.0
    %157 = vmatprep.subr.mxu0 0.0
    %158 = vmatpush1.msra.mxu0 0.0
    %159 = vmatprep.subr.mxu0 0.0
    %160 = vmatpush1.msra.mxu0 0.0
    %161 = vmatprep.subr.mxu0 0.0
    %162 = vmatpush1.msra.mxu0 0.0
    %163 = vmatprep.mubr.f32.mxu0 0.0
    %164 = vmatmul.mubr.f32.gmra.mrb[0].mxu0 %v97
    %v165 = vpop.f32.mrb[0].mxu0
    %v166 = vadd.f32 %v95, %v165
    %v167 = vpop.f32.mrb[0].mxu0
    %168 = vdwg.mxu0
    %vm169 = vcmask 24576
    %170 = vst.msk [vmem:[#allocation2] sm:$0x1] %vm169, %v166
    // Predicated region
    $region14: #{gat_forward.9} parent=1 // pred_check
      _
    $region15: #{gat_forward.9} parent=1 // pred_check_branch
      %172 = sbr.rel (0) target = $region17
    $region16: #{gat_forward.9} parent=1 // pred_region
      %s174 = ssub.s32 16, 16
      %175 = vsyncadd [#allocation3], %s174
      %s177 = sshll.u32 [#allocation2], 4
      %s178 = int_to_ptr.vmem [resolvable:$true] %s177
      %180 = dma.vmem_to_hbm [thread:$0]  %s178, 16, %s3, [#allocation3]
    $region17: #{gat_forward.9} parent=1 // pred_fallthru
      _
    // Predicated region
    $region18: #{gat_forward.9} parent=1 // pred_check
      _
    $region19: #{gat_forward.9} parent=1 // pred_check_branch
      %182 = sbr.rel (0) target = $region21
    $region20: #{gat_forward.9} parent=1 // pred_region
      %s184 = ssub.s32 16, 16
      %185 = vsyncadd [#allocation5], %s184
      %s187 = sshll.u32 [#allocation4], 4
      %s188 = int_to_ptr.vmem [resolvable:$true] %s187
      %190 = dma.vmem_to_hbm [thread:$0]  %s188, 16, %s4, [#allocation5]
    $region21: #{gat_forward.9} parent=1 // pred_fallthru
      _
    // Predicated region
    $region22: #{gat_forward.9} parent=1 // pred_check
      _
    $region23: #{gat_forward.9} parent=1 // pred_check_branch
      %192 = sbr.rel (0) target = $region25
    $region24: #{gat_forward.9} parent=1 // pred_region
      %193 = dma.done [#allocation3], 16
    $region25: #{gat_forward.9} parent=1 // pred_fallthru
      _
    // Predicated region
    $region26: #{gat_forward.9} parent=1 // pred_check
      _
    $region27: #{gat_forward.9} parent=1 // pred_check_branch
      %195 = sbr.rel (0) target = $region29
    $region28: #{gat_forward.9} parent=1 // pred_region
      %196 = dma.done [#allocation5], 16
    $region29: #{gat_forward.9} parent=1 // pred_fallthru
      _
    %197 = vsyncpa [#allocation3], 1
    %198 = vsyncpa [#allocation5], 1

// kernel: gat_forward.6
$region0: #{gat_forward.6}
  #allocation0 [shape = 'u32[]', space=smem, size = 0x4, offset = 0x4, fixed_abs, tag = 'smem constant byte address 0x4 - core index']
  #allocation1 [shape = 'u32[144,128]{1,0:T(1,128)}', space=vmem, size = 0x12000, scoped, tag = 'internal scratch']
  %s0 = inlined_call_operand.vmem [shape: f32[2,64], index: 0, kind: input, shape index: {}]
  %s1 = inlined_call_operand.vmem [shape: f32[64,2], index: 1, kind: input, shape index: {}]
  %s2 = inlined_call_operand.vmem [shape: bf16[64,32], index: 2, kind: input, shape index: {}]
  %s3 = inlined_call_operand.vmem [shape: bf16[64,64], index: 3, kind: input, shape index: {}]
  %s4 = inlined_call_operand.vmem [shape: f32[1,32], index: 4, kind: input, shape index: {}]
  %s5 = inlined_call_operand.vmem [shape: f32[1,32], index: 5, kind: input, shape index: {}]
  %s6 = inlined_call_operand.vmem [shape: f32[64,32], index: 6, kind: output, shape index: {}]
  %s7 = sld [smem:[#allocation0]]
  $region57: #{gat_forward.6} parent=0
    _
  %s9 = ssub.s32 1, %s7
  %s10 = scalar_select 0, %s9, %s7
  loop: start=0, step=1, limit=4
  $region2: #{gat_forward.6} parent=0 // loop_pre_header
    _
  $region3: #{gat_forward.6} parent=0 // loop_header
    %s12 = sphi 0, %s16
    %p13 = scmp.ge.s32.totalorder %s12, 4
    %s20 = sphi 0, %s20
    %s22 = sphi 0, %s20
    %s23 = sphi 0, %s22
    %s37 = sphi 0, %s23
    %s43 = sphi 0, %s45
    %s46 = sphi 0, %s43
    %s47 = sphi 0, %s46
    %s63 = sphi 0, %s47
    %s67 = sphi 0, %s67
    %s69 = sphi 0, %s67
    %s70 = sphi 0, %s69
    %s84 = sphi 0, %s70
    %s90 = sphi 0, %s92
    %s93 = sphi 0, %s90
    %s94 = sphi 0, %s93
    %s110 = sphi 0, %s94
    %s114 = sphi 0, %s114
    %s116 = sphi 0, %s114
    %s117 = sphi 0, %s116
    %s131 = sphi 0, %s117
    %s135 = sphi 0, %s135
    %s137 = sphi 0, %s135
    %s138 = sphi 0, %s137
    %s152 = sphi 0, %s138
    %s158 = sphi 0, %s160
    %s161 = sphi 0, %s158
    %s162 = sphi 0, %s161
    %s178 = sphi 0, %s162
  $region4: #{gat_forward.6} parent=0 // loop_header_branch
    %15 = sbr.rel (%p13) target = $region8
  $region5: #{gat_forward.6} parent=0 // loop_body
    %s17 = ssub.s32 %s12, 1
    %s18 = ssub.s32 %s12, 2
    %s19 = sadd.s32 %s12, 1
    %s21 = sadd.s32 %s20, 1
    %p24 = scmp.eq.s32.totalorder %s12, 1
    %p25 = scmp.ne.s32.totalorder %s20, %s22
    %p26 = scmp.eq.s32.totalorder %s12, 0
    %p27 = por %p25, %p26
    %p28 = scmp.ne.s32.totalorder %s20, %s22
    %p29 = scmp.eq.s32.totalorder %s17, 1
    %p30 = por %p28, %p29
    %p31 = scmp.ne.s32.totalorder %s22, %s23
    %p32 = scmp.eq.s32.totalorder %s17, 0
    %p33 = por %p31, %p32
    %p34 = scmp.ne.s32.totalorder %s22, %s23
    %p35 = scmp.eq.s32.totalorder %s18, 1
    %p36 = por %p34, %p35
    %p38 = scmp.ne.s32.totalorder %s23, %s37
    %p39 = scmp.eq.s32.totalorder %s18, 0
    %p40 = por %p38, %p39
    %s41 = ssub.s32 %s12, %s19
    %p42 = scmp.eq.s32.totalorder %s41, 0
    %s44 = sadd.s32 %s43, 1
    %s45 = scalar_select %p42, %s43, %s44
    %p48 = pneg %p42
    %p49 = scmp.eq.s32.totalorder %s12, 1
    %p50 = por %p48, %p49
    %p51 = scmp.ne.s32.totalorder %s43, %s46
    %p52 = scmp.eq.s32.totalorder %s12, 0
    %p53 = por %p51, %p52
    %p54 = scmp.ne.s32.totalorder %s43, %s46
    %p55 = scmp.eq.s32.totalorder %s17, 1
    %p56 = por %p54, %p55
    %p57 = scmp.ne.s32.totalorder %s46, %s47
    %p58 = scmp.eq.s32.totalorder %s17, 0
    %p59 = por %p57, %p58
    %p60 = scmp.ne.s32.totalorder %s46, %s47
    %p61 = scmp.eq.s32.totalorder %s18, 1
    %p62 = por %p60, %p61
    %p64 = scmp.ne.s32.totalorder %s47, %s63
    %p65 = scmp.eq.s32.totalorder %s18, 0
    %p66 = por %p64, %p65
    %s68 = sadd.s32 %s67, 1
    %p71 = scmp.eq.s32.totalorder %s12, 1
    %p72 = scmp.ne.s32.totalorder %s67, %s69
    %p73 = scmp.eq.s32.totalorder %s12, 0
    %p74 = por %p72, %p73
    %p75 = scmp.ne.s32.totalorder %s67, %s69
    %p76 = scmp.eq.s32.totalorder %s17, 1
    %p77 = por %p75, %p76
    %p78 = scmp.ne.s32.totalorder %s69, %s70
    %p79 = scmp.eq.s32.totalorder %s17, 0
    %p80 = por %p78, %p79
    %p81 = scmp.ne.s32.totalorder %s69, %s70
    %p82 = scmp.eq.s32.totalorder %s18, 1
    %p83 = por %p81, %p82
    %p85 = scmp.ne.s32.totalorder %s70, %s84
    %p86 = scmp.eq.s32.totalorder %s18, 0
    %p87 = por %p85, %p86
    %s88 = ssub.s32 %s12, %s19
    %p89 = scmp.eq.s32.totalorder %s88, 0
    %s91 = sadd.s32 %s90, 1
    %s92 = scalar_select %p89, %s90, %s91
    %p95 = pneg %p89
    %p96 = scmp.eq.s32.totalorder %s12, 1
    %p97 = por %p95, %p96
    %p98 = scmp.ne.s32.totalorder %s90, %s93
    %p99 = scmp.eq.s32.totalorder %s12, 0
    %p100 = por %p98, %p99
    %p101 = scmp.ne.s32.totalorder %s90, %s93
    %p102 = scmp.eq.s32.totalorder %s17, 1
    %p103 = por %p101, %p102
    %p104 = scmp.ne.s32.totalorder %s93, %s94
    %p105 = scmp.eq.s32.totalorder %s17, 0
    %p106 = por %p104, %p105
    %p107 = scmp.ne.s32.totalorder %s93, %s94
    %p108 = scmp.eq.s32.totalorder %s18, 1
    %p109 = por %p107, %p108
    %p111 = scmp.ne.s32.totalorder %s94, %s110
    %p112 = scmp.eq.s32.totalorder %s18, 0
    %p113 = por %p111, %p112
    %s115 = sadd.s32 %s114, 1
    %p118 = scmp.eq.s32.totalorder %s12, 1
    %p119 = scmp.ne.s32.totalorder %s114, %s116
    %p120 = scmp.eq.s32.totalorder %s12, 0
    %p121 = por %p119, %p120
    %p122 = scmp.ne.s32.totalorder %s114, %s116
    %p123 = scmp.eq.s32.totalorder %s17, 1
    %p124 = por %p122, %p123
    %p125 = scmp.ne.s32.totalorder %s116, %s117
    %p126 = scmp.eq.s32.totalorder %s17, 0
    %p127 = por %p125, %p126
    %p128 = scmp.ne.s32.totalorder %s116, %s117
    %p129 = scmp.eq.s32.totalorder %s18, 1
    %p130 = por %p128, %p129
    %p132 = scmp.ne.s32.totalorder %s117, %s131
    %p133 = scmp.eq.s32.totalorder %s18, 0
    %p134 = por %p132, %p133
    %s136 = sadd.s32 %s135, 1
    %p139 = scmp.eq.s32.totalorder %s12, 1
    %p140 = scmp.ne.s32.totalorder %s135, %s137
    %p141 = scmp.eq.s32.totalorder %s12, 0
    %p142 = por %p140, %p141
    %p143 = scmp.ne.s32.totalorder %s135, %s137
    %p144 = scmp.eq.s32.totalorder %s17, 1
    %p145 = por %p143, %p144
    %p146 = scmp.ne.s32.totalorder %s137, %s138
    %p147 = scmp.eq.s32.totalorder %s17, 0
    %p148 = por %p146, %p147
    %p149 = scmp.ne.s32.totalorder %s137, %s138
    %p150 = scmp.eq.s32.totalorder %s18, 1
    %p151 = por %p149, %p150
    %p153 = scmp.ne.s32.totalorder %s138, %s152
    %p154 = scmp.eq.s32.totalorder %s18, 0
    %p155 = por %p153, %p154
    %s156 = ssub.s32 %s12, %s19
    %p157 = scmp.eq.s32.totalorder %s156, 0
    %s159 = sadd.s32 %s158, 1
    %s160 = scalar_select %p157, %s158, %s159
    %p163 = pneg %p157
    %p164 = scmp.eq.s32.totalorder %s12, 1
    %p165 = por %p163, %p164
    %p166 = scmp.ne.s32.totalorder %s158, %s161
    %p167 = scmp.eq.s32.totalorder %s12, 0
    %p168 = por %p166, %p167
    %p169 = scmp.ne.s32.totalorder %s158, %s161
    %p170 = scmp.eq.s32.totalorder %s17, 1
    %p171 = por %p169, %p170
    %p172 = scmp.ne.s32.totalorder %s161, %s162
    %p173 = scmp.eq.s32.totalorder %s17, 0
    %p174 = por %p172, %p173
    %p175 = scmp.ne.s32.totalorder %s161, %s162
    %p176 = scmp.eq.s32.totalorder %s18, 1
    %p177 = por %p175, %p176
    %p179 = scmp.ne.s32.totalorder %s162, %s178
    %p180 = scmp.eq.s32.totalorder %s18, 0
    %p181 = por %p179, %p180
    %p182 = scmp.le.s32.totalorder 1, %s12
    %p183 = scmp.lt.s32.totalorder %s12, 3
    %p184 = pnand %p182, %p183
    %p185 = pneg %p184
    // Predicated region
    $region9: #{gat_forward.6} parent=5 // pred_check
      _
    $region10: #{gat_forward.6} parent=5 // pred_check_branch
      %187 = sbr.rel (%p184) target = $region12
    $region11: #{gat_forward.6} parent=5 // pred_region
      %s188 = ssub.s32 %s12, 1
      // Predicated region
      $region13: #{gat_forward.6} parent=11 // pred_check
        %p189 = pneg %p33
      $region14: #{gat_forward.6} parent=11 // pred_check_branch
        %191 = sbr.rel (%p189) target = $region16
      $region15: #{gat_forward.6} parent=11 // pred_region
        _
      $region16: #{gat_forward.6} parent=11 // pred_fallthru
        _
      // Predicated region
      $region17: #{gat_forward.6} parent=11 // pred_check
        %p192 = pneg %p80
      $region18: #{gat_forward.6} parent=11 // pred_check_branch
        %194 = sbr.rel (%p192) target = $region20
      $region19: #{gat_forward.6} parent=11 // pred_region
        _
      $region20: #{gat_forward.6} parent=11 // pred_fallthru
        _
      // Predicated region
      $region21: #{gat_forward.6} parent=11 // pred_check
        %p195 = pneg %p127
      $region22: #{gat_forward.6} parent=11 // pred_check_branch
        %197 = sbr.rel (%p195) target = $region24
      $region23: #{gat_forward.6} parent=11 // pred_region
        _
      $region24: #{gat_forward.6} parent=11 // pred_fallthru
        _
      // Predicated region
      $region25: #{gat_forward.6} parent=11 // pred_check
        %p198 = pneg %p148
      $region26: #{gat_forward.6} parent=11 // pred_check_branch
        %200 = sbr.rel (%p198) target = $region28
      $region27: #{gat_forward.6} parent=11 // pred_region
        _
      $region28: #{gat_forward.6} parent=11 // pred_fallthru
        _
    $region12: #{gat_forward.6} parent=5 // pred_fallthru
      _
    %p201 = scmp.lt.s32.totalorder %s12, 2
    // Predicated region
    $region29: #{gat_forward.6} parent=5 // pred_check
      %p202 = pneg %p201
    $region30: #{gat_forward.6} parent=5 // pred_check_branch
      %204 = sbr.rel (%p202) target = $region32
    $region31: #{gat_forward.6} parent=5 // pred_region
      // Predicated region
      $region33: #{gat_forward.6} parent=31 // pred_check
        %p205 = pneg %p53
      $region34: #{gat_forward.6} parent=31 // pred_check_branch
        %207 = sbr.rel (%p205) target = $region36
      $region35: #{gat_forward.6} parent=31 // pred_region
        %s208 = smul.u32 4, %s12
        %p209 = scmp.lt.s32.totalorder %s208, 7
        %s210 = scalar_select %p209, %s208, 7
        %s211 = smul.addr %s210, 8
        %s212 = scalar_lea.vmem %s1, %s211
        %s213 = smul.u32 4, %s12
      $region36: #{gat_forward.6} parent=31 // pred_fallthru
        _
      // Predicated region
      $region37: #{gat_forward.6} parent=31 // pred_check
        %p214 = pneg %p100
      $region38: #{gat_forward.6} parent=31 // pred_check_branch
        %216 = sbr.rel (%p214) target = $region40
      $region39: #{gat_forward.6} parent=31 // pred_region
        %s217 = smul.u32 4, %s12
        %p218 = scmp.lt.s32.totalorder %s217, 7
        %s219 = scalar_select %p218, %s217, 7
        %s220 = smul.addr %s219, 4
        %s221 = scalar_lea.vmem %s3, %s220
        %s222 = smul.u32 4, %s12
      $region40: #{gat_forward.6} parent=31 // pred_fallthru
        _
    $region32: #{gat_forward.6} parent=5 // pred_fallthru
      _
    %p223 = scmp.le.s32.totalorder 1, %s12
    %p224 = scmp.lt.s32.totalorder %s12, 3
    %p225 = pnand %p223, %p224
    %p226 = pneg %p225
    // Predicated region
    $region41: #{gat_forward.6} parent=5 // pred_check
      _
    $region42: #{gat_forward.6} parent=5 // pred_check_branch
      %228 = sbr.rel (%p225) target = $region44
    $region43: #{gat_forward.6} parent=5 // pred_region
      %s229 = ssub.s32 %s12, 1
      %p230 = pneg %p33
      %p231 = pneg %p30
      %s232 = smul.u32 4, %s17
      %p233 = scmp.lt.s32.totalorder %s232, 7
      %s234 = scalar_select %p233, %s232, 7
      %s235 = smul.addr %s234, 8
      %s236 = scalar_lea.vmem %s1, %s235
      %p237 = pneg %p59
      %p238 = pneg %p56
      %p239 = pneg %p80
      %p240 = pneg %p77
      %s241 = smul.u32 4, %s17
      %p242 = scmp.lt.s32.totalorder %s241, 7
      %s243 = scalar_select %p242, %s241, 7
      %s244 = smul.addr %s243, 4
      %s245 = scalar_lea.vmem %s3, %s244
      %p246 = pneg %p106
      %p247 = pneg %p103
      %p248 = pneg %p127
      %p249 = pneg %p124
      %p250 = pneg %p148
      %p251 = pneg %p145
      %p252 = pneg %p174
      %p253 = pneg %p171
      %s254 = smul.u32 4, %s17
      %p255 = scmp.lt.s32.totalorder %s254, 7
      %s256 = scalar_select %p255, %s254, 7
      %s257 = smul.addr %s256, 8
      %s258 = scalar_lea.vmem %s6, %s257
      %s259 = smul.u32 4, %s17
      %p260 = scmp.lt.s32.totalorder %s259, 7
      %s261 = scalar_select %p260, %s259, 7
      %s262 = smul.addr %s261, 8
      %s263 = scalar_lea.vmem %s1, %s262
      %s264 = smul.u32 4, %s17
      %s265 = smul.u32 4, %s17
      %p266 = scmp.lt.s32.totalorder %s265, 7
      %s267 = scalar_select %p266, %s265, 7
      %s268 = smul.addr %s267, 4
      %s269 = scalar_lea.vmem %s3, %s268
      %s270 = smul.u32 4, %s17
      %s271 = smul.u32 4, %s17
      %p272 = scmp.lt.s32.totalorder %s271, 7
      %s273 = scalar_select %p272, %s271, 7
      %s274 = smul.addr %s273, 8
      %s275 = scalar_lea.vmem %s6, %s274
      %s276 = smul.u32 4, %s17
      %v278 = vld [vmem:[%s269] sm:$0xf]
      %v279 = vld [vmem:[%s269 + $0x4] sm:$0xf]
      %v280 = vld [vmem:[%s269 + $0x8] sm:$0xf]
      %v281 = vld [vmem:[%s269 + $0xc] sm:$0xf]
      %v282 = vunpack.c.l.bf16 %v278
      %v283 = vunpack.c.l.bf16 %v279
      %v284 = vunpack.c.l.bf16 %v280
      %v285 = vunpack.c.l.bf16 %v281
      %vm286 = vcmask 523264
      %v287 = vsel %vm286, %v282, -inf
      %288 = vmax.xlane.f32.xlu0 %v287
      %v289 = vpop.xlane.xlu0 %288
      %v290 = vsel %vm286, %v283, -inf
      %291 = vmax.xlane.f32.xlu0 %v290
      %v292 = vpop.xlane.xlu0 %291
      %v293 = vsel %vm286, %v284, -inf
      %294 = vmax.xlane.f32.xlu0 %v293
      %v295 = vpop.xlane.xlu0 %294
      %v296 = vsel %vm286, %v285, -inf
      %297 = vmax.xlane.f32.xlu0 %v296
      %v298 = vpop.xlane.xlu0 %297
      %vm299 = vcmp.gt.f32.partialorder %v289, -1e+20
      %vm300 = vcmp.gt.f32.partialorder %v292, -1e+20
      %vm301 = vcmp.gt.f32.partialorder %v295, -1e+20
      %vm302 = vcmp.gt.f32.partialorder %v298, -1e+20
      %v303 = vld [vmem:[%s263] sm:$0xff]
      %v304 = vld [vmem:[%s263 + $0x8] sm:$0xff]
      %v305 = vld [vmem:[%s263 + $0x10] sm:$0xff]
      %v306 = vld [vmem:[%s263 + $0x18] sm:$0xff]
      %v307 = vld [vmem:[%s0] sm:$0x1]
      %309 = vset.pattern.permute.xlu0 0
      %310 = vperm.xlu0 %309, %v303
      %v311 = vpop.permute.xlu0 %310
      %314 = vset.pattern.permute.xlu0 0
      %315 = vperm.xlu0 %314, %v304
      %v316 = vpop.permute.xlu0 %315
      %319 = vset.pattern.permute.xlu0 0
      %320 = vperm.xlu0 %319, %v305
      %v321 = vpop.permute.xlu0 %320
      %324 = vset.pattern.permute.xlu0 0
      %325 = vperm.xlu0 %324, %v306
      %v326 = vpop.permute.xlu0 %325
      %v328 = vlaneseq
      %v329 = vshrl.u32 %v328, 7
      %v330 = vsub.s32 0, %v329
      %v331 = vrot.slane %v307, %v330
      %v332 = vadd.f32 %v311, %v331
      %v333 = vadd.f32 %v316, %v331
      %v334 = vadd.f32 %v321, %v331
      %v335 = vadd.f32 %v326, %v331
      %vm336 = vcmp.gt.f32.partialorder %v332, 0.0
      %vm337 = vcmp.gt.f32.partialorder %v333, 0.0
      %vm338 = vcmp.gt.f32.partialorder %v334, 0.0
      %vm339 = vcmp.gt.f32.partialorder %v335, 0.0
      %v340 = vmul.f32 %v332, 0.2
      %v341 = vmul.f32 %v333, 0.2
      %v342 = vmul.f32 %v334, 0.2
      %v343 = vmul.f32 %v335, 0.2
      %v344 = vsel %vm336, %v332, %v340
      %v345 = vsel %vm337, %v333, %v341
      %v346 = vsel %vm338, %v334, %v342
      %v347 = vsel %vm339, %v335, %v343
      %v348 = vadd.f32 %v344, %v282
      %v349 = vadd.f32 %v345, %v283
      %v350 = vadd.f32 %v346, %v284
      %v351 = vadd.f32 %v347, %v285
      %v352 = vsel %vm286, %v348, -inf
      %353 = vmax.xlane.f32.xlu0 %v352
      %v354 = vpop.xlane.xlu0 %353
      %v355 = vsel %vm286, %v349, -inf
      %356 = vmax.xlane.f32.xlu0 %v355
      %v357 = vpop.xlane.xlu0 %356
      %v358 = vsel %vm286, %v350, -inf
      %359 = vmax.xlane.f32.xlu0 %v358
      %v360 = vpop.xlane.xlu0 %359
      %v361 = vsel %vm286, %v351, -inf
      %362 = vmax.xlane.f32.xlu0 %v361
      %v363 = vpop.xlane.xlu0 %362
      %v364 = vsub.f32 %v348, %v354
      %v365 = vsub.f32 %v349, %v357
      %v366 = vsub.f32 %v350, %v360
      %v367 = vsub.f32 %v351, %v363
      %v368 = vmul.f32 %v364, 1.442695
      %v369 = vpow.pop %v368
      %v370 = vmul.f32 %v365, 1.442695
      %v371 = vpow.pop %v370
      %v372 = vmul.f32 %v366, 1.442695
      %v373 = vpow.pop %v372
      %v374 = vmul.f32 %v367, 1.442695
      %v375 = vpow.pop %v374
      %v376 = vsel %vm286, %v369, 0.0
      %377 = vadd.xlane.f32.xlu0 %v376
      %v378 = vpop.xlane.xlu0 %377
      %v379 = vsel %vm286, %v371, 0.0
      %380 = vadd.xlane.f32.xlu0 %v379
      %v381 = vpop.xlane.xlu0 %380
      %v382 = vsel %vm286, %v373, 0.0
      %383 = vadd.xlane.f32.xlu0 %v382
      %v384 = vpop.xlane.xlu0 %383
      %v385 = vsel %vm286, %v375, 0.0
      %386 = vadd.xlane.f32.xlu0 %v385
      %v387 = vpop.xlane.xlu0 %386
      %v388 = vld [vmem:[%s2] sm:$0xf]
      %v389 = vld [vmem:[%s2 + $0x4] sm:$0xf]
      %v390 = vld [vmem:[%s2 + $0x8] sm:$0xf]
      %v391 = vld [vmem:[%s2 + $0xc] sm:$0xf]
      %v392 = vld [vmem:[%s2 + $0x10] sm:$0xf]
      %v393 = vld [vmem:[%s2 + $0x14] sm:$0xf]
      %v394 = vld [vmem:[%s2 + $0x18] sm:$0xf]
      %v395 = vld [vmem:[%s2 + $0x1c] sm:$0xf]
      %v396 = vpack.c.bf16 %v371, %v369
      %v397 = vpack.c.bf16 %v375, %v373
      %v406 = vunpack.c.l.b16 %v388
      %v407 = vunpack.c.l.b16 %v389
      %v408 = vunpack.c.l.b16 %v390
      %v409 = vunpack.c.l.b16 %v391
      %v410 = vunpack.c.l.b16 %v392
      %v411 = vunpack.c.l.b16 %v393
      %v412 = vunpack.c.l.b16 %v394
      %v413 = vunpack.c.l.b16 %v395
      %v414 = vpack.c.b16 %v407, %v406
      %v415 = vpack.c.b16 %v409, %v408
      %v416 = vpack.c.b16 %v411, %v410
      %v417 = vpack.c.b16 %v413, %v412
      %v423 = vsel %vm286, %v396, 0
      %v426 = vsel %vm286, %v397, 0
      %428 = vmatprep.subr.bf16.mxu0 0
      %429 = vmatpush1.bf16.msra.mxu0 %v414
      %430 = vmatprep.subr.bf16.mxu0 0
      %431 = vmatpush1.bf16.msra.mxu0 %v415
      %432 = vmatprep.subr.bf16.mxu0 0
      %433 = vmatpush1.bf16.msra.mxu0 %v416
      %434 = vmatprep.subr.bf16.mxu0 0
      %435 = vmatpush1.bf16.msra.mxu0 %v417
      %436 = vmatprep.subr.bf16.mxu0 0
      %437 = vmatpush1.bf16.msra.mxu0 0
      %438 = vmatprep.subr.bf16.mxu0 0
      %439 = vmatpush1.bf16.msra.mxu0 0
      %440 = vmatprep.subr.bf16.mxu0 0
      %441 = vmatpush1.bf16.msra.mxu0 0
      %442 = vmatprep.subr.bf16.mxu0 0
      %443 = vmatpush1.bf16.msra.mxu0 0
      %444 = vmatprep.subr.bf16.mxu0 0
      %445 = vmatpush1.bf16.msra.mxu0 0
      %446 = vmatprep.subr.bf16.mxu0 0
      %447 = vmatpush1.bf16.msra.mxu0 0
      %448 = vmatprep.subr.bf16.mxu0 0
      %449 = vmatpush1.bf16.msra.mxu0 0
      %450 = vmatprep.subr.bf16.mxu0 0
      %451 = vmatpush1.bf16.msra.mxu0 0
      %452 = vmatprep.subr.bf16.mxu0 0
      %453 = vmatpush1.bf16.msra.mxu0 0
      %454 = vmatprep.subr.bf16.mxu0 0
      %455 = vmatpush1.bf16.msra.mxu0 0
      %456 = vmatprep.subr.bf16.mxu0 0
      %457 = vmatpush1.bf16.msra.mxu0 0
      %458 = vmatprep.subr.bf16.mxu0 0
      %459 = vmatpush1.bf16.msra.mxu0 0
      %460 = vmatprep.mubr.bf16.mxu0 0
      %461 = vmatmul.mubr.bf16.gmra.mrb[0].mxu0 %v423
      %v462 = vpop.f32.mrb[0].mxu0
      %v463 = vadd.f32 0.0, %v462
      %v464 = vpop.f32.mrb[0].mxu0
      %v465 = vpop.f32.mrb[0].mxu0
      %v466 = vadd.f32 0.0, %v465
      %v467 = vpop.f32.mrb[0].mxu0
      %468 = vmatprep.mubr.bf16.mxu0 0
      %469 = vmatmul.mubr.bf16.gmra.mrb[0].mxu0 %v426
      %v470 = vpop.f32.mrb[0].mxu0
      %v471 = vadd.f32 0.0, %v470
      %v472 = vpop.f32.mrb[0].mxu0
      %v473 = vpop.f32.mrb[0].mxu0
      %v474 = vadd.f32 0.0, %v473
      %v475 = vpop.f32.mrb[0].mxu0
      %476 = vdwg.mxu0
      %v477 = vrcp.pop %v378
      %v478 = vrcp.pop %v381
      %v479 = vrcp.pop %v384
      %v480 = vrcp.pop %v387
      %v481 = vmul.f32 %v463, %v477
      %v482 = vmul.f32 %v466, %v478
      %v483 = vmul.f32 %v471, %v479
      %v484 = vmul.f32 %v474, %v480
      %v485 = vld [vmem:[%s0 + $0x1] sm:$0x1]
      %486 = vset.pattern.permute.xlu0 1
      %487 = vperm.xlu0 %486, %v303
      %v488 = vpop.permute.xlu0 %487
      %490 = vset.pattern.permute.xlu0 1
      %491 = vperm.xlu0 %490, %v304
      %v492 = vpop.permute.xlu0 %491
      %494 = vset.pattern.permute.xlu0 1
      %495 = vperm.xlu0 %494, %v305
      %v496 = vpop.permute.xlu0 %495
      %498 = vset.pattern.permute.xlu0 1
      %499 = vperm.xlu0 %498, %v306
      %v500 = vpop.permute.xlu0 %499
      %v502 = vlaneseq
      %v503 = vshrl.u32 %v502, 7
      %v504 = vsub.s32 0, %v503
      %v505 = vrot.slane %v485, %v504
      %v506 = vadd.f32 %v488, %v505
      %v507 = vadd.f32 %v492, %v505
      %v508 = vadd.f32 %v496, %v505
      %v509 = vadd.f32 %v500, %v505
      %vm510 = vcmp.gt.f32.partialorder %v506, 0.0
      %vm511 = vcmp.gt.f32.partialorder %v507, 0.0
      %vm512 = vcmp.gt.f32.partialorder %v508, 0.0
      %vm513 = vcmp.gt.f32.partialorder %v509, 0.0
      %v514 = vmul.f32 %v506, 0.2
      %v515 = vmul.f32 %v507, 0.2
      %v516 = vmul.f32 %v508, 0.2
      %v517 = vmul.f32 %v509, 0.2
      %v518 = vsel %vm510, %v506, %v514
      %v519 = vsel %vm511, %v507, %v515
      %v520 = vsel %vm512, %v508, %v516
      %v521 = vsel %vm513, %v509, %v517
      %v522 = vadd.f32 %v518, %v282
      %v523 = vadd.f32 %v519, %v283
      %v524 = vadd.f32 %v520, %v284
      %v525 = vadd.f32 %v521, %v285
      %v526 = vsel %vm286, %v522, -inf
      %527 = vmax.xlane.f32.xlu0 %v526
      %v528 = vpop.xlane.xlu0 %527
      %v529 = vsel %vm286, %v523, -inf
      %530 = vmax.xlane.f32.xlu0 %v529
      %v531 = vpop.xlane.xlu0 %530
      %v532 = vsel %vm286, %v524, -inf
      %533 = vmax.xlane.f32.xlu0 %v532
      %v534 = vpop.xlane.xlu0 %533
      %v535 = vsel %vm286, %v525, -inf
      %536 = vmax.xlane.f32.xlu0 %v535
      %v537 = vpop.xlane.xlu0 %536
      %v538 = vsub.f32 %v522, %v528
      %v539 = vsub.f32 %v523, %v531
      %v540 = vsub.f32 %v524, %v534
      %v541 = vsub.f32 %v525, %v537
      %v542 = vmul.f32 %v538, 1.442695
      %v543 = vpow.pop %v542
      %v544 = vmul.f32 %v539, 1.442695
      %v545 = vpow.pop %v544
      %v546 = vmul.f32 %v540, 1.442695
      %v547 = vpow.pop %v546
      %v548 = vmul.f32 %v541, 1.442695
      %v549 = vpow.pop %v548
      %v550 = vsel %vm286, %v543, 0.0
      %551 = vadd.xlane.f32.xlu0 %v550
      %v552 = vpop.xlane.xlu0 %551
      %v553 = vsel %vm286, %v545, 0.0
      %554 = vadd.xlane.f32.xlu0 %v553
      %v555 = vpop.xlane.xlu0 %554
      %v556 = vsel %vm286, %v547, 0.0
      %557 = vadd.xlane.f32.xlu0 %v556
      %v558 = vpop.xlane.xlu0 %557
      %v559 = vsel %vm286, %v549, 0.0
      %560 = vadd.xlane.f32.xlu0 %v559
      %v561 = vpop.xlane.xlu0 %560
      %v562 = vpack.c.bf16 %v545, %v543
      %v563 = vpack.c.bf16 %v549, %v547
      %564 = vrot.lane.b32.xlu0 %v414, 112
      %v565 = vpop.permute.xlu0 %564
      %566 = vrot.lane.b32.xlu0 %v415, 112
      %v567 = vpop.permute.xlu0 %566
      %568 = vrot.lane.b32.xlu0 %v416, 112
      %v569 = vpop.permute.xlu0 %568
      %570 = vrot.lane.b32.xlu0 %v417, 112
      %v571 = vpop.permute.xlu0 %570
      %v577 = vsel %vm286, %v562, 0
      %v580 = vsel %vm286, %v563, 0
      %582 = vmatprep.subr.bf16.mxu0 0
      %583 = vmatpush1.bf16.msra.mxu0 %v565
      %584 = vmatprep.subr.bf16.mxu0 0
      %585 = vmatpush1.bf16.msra.mxu0 %v567
      %586 = vmatprep.subr.bf16.mxu0 0
      %587 = vmatpush1.bf16.msra.mxu0 %v569
      %588 = vmatprep.subr.bf16.mxu0 0
      %589 = vmatpush1.bf16.msra.mxu0 %v571
      %590 = vmatprep.subr.bf16.mxu0 0
      %591 = vmatpush1.bf16.msra.mxu0 0
      %592 = vmatprep.subr.bf16.mxu0 0
      %593 = vmatpush1.bf16.msra.mxu0 0
      %594 = vmatprep.subr.bf16.mxu0 0
      %595 = vmatpush1.bf16.msra.mxu0 0
      %596 = vmatprep.subr.bf16.mxu0 0
      %597 = vmatpush1.bf16.msra.mxu0 0
      %598 = vmatprep.subr.bf16.mxu0 0
      %599 = vmatpush1.bf16.msra.mxu0 0
      %600 = vmatprep.subr.bf16.mxu0 0
      %601 = vmatpush1.bf16.msra.mxu0 0
      %602 = vmatprep.subr.bf16.mxu0 0
      %603 = vmatpush1.bf16.msra.mxu0 0
      %604 = vmatprep.subr.bf16.mxu0 0
      %605 = vmatpush1.bf16.msra.mxu0 0
      %606 = vmatprep.subr.bf16.mxu0 0
      %607 = vmatpush1.bf16.msra.mxu0 0
      %608 = vmatprep.subr.bf16.mxu0 0
      %609 = vmatpush1.bf16.msra.mxu0 0
      %610 = vmatprep.subr.bf16.mxu0 0
      %611 = vmatpush1.bf16.msra.mxu0 0
      %612 = vmatprep.subr.bf16.mxu0 0
      %613 = vmatpush1.bf16.msra.mxu0 0
      %614 = vmatprep.mubr.bf16.mxu0 0
      %615 = vmatmul.mubr.bf16.gmra.mrb[0].mxu0 %v577
      %v616 = vpop.f32.mrb[0].mxu0
      %v617 = vadd.f32 0.0, %v616
      %v618 = vpop.f32.mrb[0].mxu0
      %v619 = vpop.f32.mrb[0].mxu0
      %v620 = vadd.f32 0.0, %v619
      %v621 = vpop.f32.mrb[0].mxu0
      %622 = vmatprep.mubr.bf16.mxu0 0
      %623 = vmatmul.mubr.bf16.gmra.mrb[0].mxu0 %v580
      %v624 = vpop.f32.mrb[0].mxu0
      %v625 = vadd.f32 0.0, %v624
      %v626 = vpop.f32.mrb[0].mxu0
      %v627 = vpop.f32.mrb[0].mxu0
      %v628 = vadd.f32 0.0, %v627
      %v629 = vpop.f32.mrb[0].mxu0
      %630 = vdwg.mxu0
      %v631 = vrcp.pop %v552
      %v632 = vrcp.pop %v555
      %v633 = vrcp.pop %v558
      %v634 = vrcp.pop %v561
      %v635 = vmul.f32 %v617, %v631
      %v636 = vmul.f32 %v620, %v632
      %v637 = vmul.f32 %v625, %v633
      %v638 = vmul.f32 %v628, %v634
      %643 = vrot.lane.b32.xlu0 %v635, 16
      %v644 = vpop.permute.xlu0 %643
      %645 = vrot.lane.b32.xlu0 %v636, 16
      %v646 = vpop.permute.xlu0 %645
      %647 = vrot.lane.b32.xlu0 %v637, 16
      %v648 = vpop.permute.xlu0 %647
      %649 = vrot.lane.b32.xlu0 %v638, 16
      %v650 = vpop.permute.xlu0 %649
      %vm655 = vcmask 130048
      %v656 = vsel %vm655, %v481, %v644
      %v657 = vsel %vm655, %v482, %v646
      %v658 = vsel %vm655, %v483, %v648
      %v659 = vsel %vm655, %v484, %v650
      %v660 = vsel %vm299, 1, 0
      %v661 = vsel %vm300, 1, 0
      %v662 = vsel %vm301, 1, 0
      %v663 = vsel %vm302, 1, 0
      %vm664 = vcmp.eq.s32.totalorder %v660, 1
      %vm665 = vcmp.eq.s32.totalorder %v661, 1
      %vm666 = vcmp.eq.s32.totalorder %v662, 1
      %vm667 = vcmp.eq.s32.totalorder %v663, 1
      %v668 = vsel %vm664, %v656, 0.0
      %v669 = vsel %vm665, %v657, 0.0
      %v670 = vsel %vm666, %v658, 0.0
      %v671 = vsel %vm667, %v659, 0.0
      %v672 = vld [vmem:[%s4] sm:$0x1]
      %v674 = vlaneseq
      %v675 = vshrl.u32 %v674, 7
      %v676 = vsub.s32 0, %v675
      %v677 = vrot.slane %v672, %v676
      %v679 = vmul.f32 %v668, %v677
      %v680 = vmul.f32 %v669, %v677
      %v681 = vmul.f32 %v670, %v677
      %v682 = vmul.f32 %v671, %v677
      %v683 = vld [vmem:[%s5] sm:$0x1]
      %v685 = vlaneseq
      %v686 = vshrl.u32 %v685, 7
      %v687 = vsub.s32 0, %v686
      %v688 = vrot.slane %v683, %v687
      %v690 = vadd.f32 %v679, %v688
      %v691 = vadd.f32 %v680, %v688
      %v692 = vadd.f32 %v681, %v688
      %v693 = vadd.f32 %v682, %v688
      %vm694 = vcmp.gt.f32.partialorder %v690, 0.0
      %vm695 = vcmp.gt.f32.partialorder %v691, 0.0
      %vm696 = vcmp.gt.f32.partialorder %v692, 0.0
      %vm697 = vcmp.gt.f32.partialorder %v693, 0.0
      %v698 = vmin.f32 %v690, 0.0
      %v699 = vmin.f32 %v691, 0.0
      %v700 = vmin.f32 %v692, 0.0
      %v701 = vmin.f32 %v693, 0.0
      %v702 = vmul.f32 %v698, 1.442695
      %v703 = vpow.pop %v702
      %v704 = vmul.f32 %v699, 1.442695
      %v705 = vpow.pop %v704
      %v706 = vmul.f32 %v700, 1.442695
      %v707 = vpow.pop %v706
      %v708 = vmul.f32 %v701, 1.442695
      %v709 = vpow.pop %v708
      %v710 = vsub.f32 %v703, 1.0
      %v711 = vsub.f32 %v705, 1.0
      %v712 = vsub.f32 %v707, 1.0
      %v713 = vsub.f32 %v709, 1.0
      %v714 = vsel %vm694, %v690, %v710
      %v715 = vsel %vm695, %v691, %v711
      %v716 = vsel %vm696, %v692, %v712
      %v717 = vsel %vm697, %v693, %v713
      %vm718 = vcmask 261120
      %719 = vst.msk [vmem:[%s275] sm:$0xff] %vm718, %v714
      %720 = vst.msk [vmem:[%s275 + $0x8] sm:$0xff] %vm718, %v715
      %721 = vst.msk [vmem:[%s275 + $0x10] sm:$0xff] %vm718, %v716
      %722 = vst.msk [vmem:[%s275 + $0x18] sm:$0xff] %vm718, %v717
      %s723 = smul.u32 4, %s17
      %p724 = scmp.lt.s32.totalorder %s723, 7
      %s725 = scalar_select %p724, %s723, 7
      %s726 = smul.addr %s725, 8
      %s727 = scalar_lea.vmem %s6, %s726
      // Predicated region
      $region45: #{gat_forward.6} parent=43 // pred_check
        %p728 = pneg %p171
      $region46: #{gat_forward.6} parent=43 // pred_check_branch
        %730 = sbr.rel (%p728) target = $region48
      $region47: #{gat_forward.6} parent=43 // pred_region
        %s731 = smul.u32 4, %s17
      $region48: #{gat_forward.6} parent=43 // pred_fallthru
        _
    $region44: #{gat_forward.6} parent=5 // pred_fallthru
      _
    %p732 = scmp.le.s32.totalorder 2, %s12
    // Predicated region
    $region49: #{gat_forward.6} parent=5 // pred_check
      %p733 = pneg %p732
    $region50: #{gat_forward.6} parent=5 // pred_check_branch
      %735 = sbr.rel (%p733) target = $region52
    $region51: #{gat_forward.6} parent=5 // pred_region
      %s736 = ssub.s32 %s12, 2
      // Predicated region
      $region53: #{gat_forward.6} parent=51 // pred_check
        %p737 = pneg %p177
      $region54: #{gat_forward.6} parent=51 // pred_check_branch
        %739 = sbr.rel (%p737) target = $region56
      $region55: #{gat_forward.6} parent=51 // pred_region
        %s740 = smul.u32 4, %s18
        %p741 = scmp.lt.s32.totalorder %s740, 7
        %s742 = scalar_select %p741, %s740, 7
        %s743 = smul.addr %s742, 8
        %s744 = scalar_lea.vmem %s6, %s743
      $region56: #{gat_forward.6} parent=51 // pred_fallthru
        _
    $region52: #{gat_forward.6} parent=5 // pred_fallthru
      _
  $region6: #{gat_forward.6} parent=0 // loop_footer
    %s16 = sadd.s32 1, %s12
  $region7: #{gat_forward.6} parent=0 // loop_footer_branch
    %11 = sbr.rel target = $region3
  $region8: #{gat_forward.6} parent=0 // loop_exit
    _

</llo_original>
